<compile_context>
chip_gen: v5e
topology: v5e:2x2
jax: 0.10.0
libtpu: 0.0.40
codegen_flags: <defaults>
</compile_context>

<pallas_src>
import math

import jax
import jax.numpy as jnp
from jax import lax
from jax.experimental import pallas as pl
from jax.experimental.pallas import tpu as pltpu

EPS_GIN = 0.0            # GINConv default eps (train_eps=False)
LEAKY_SLOPE = 1.5        # LeakyReLU(1.5)
NORM_EPS = 1e-12         # F.normalize default eps


def _round_up(a, b):
    return ((a + b - 1) // b) * b


def _vmem_capacity_bytes():
    try:
        return int(pltpu.get_tpu_info().vmem_capacity_bytes)
    except Exception:
        return 64 << 20   # conservative (v7x per-core physical VMEM)


def _choose_tiles(n_nodes):
    """MXU-friendly (tile_m, tile_k, num_splits).  K-tiling bounds per-step
    VMEM independently of N, so tiles never collapse below 128 rows for big
    graphs; generation-aware VMEM (128 MiB on v5e/v6e) allows bigger rows."""
    vmem_cap = _vmem_capacity_bytes()
    big_vmem = vmem_cap >= (100 << 20)            # v5e / v6e: 128 MiB physical
    if n_nodes < 256:
        # Tiny graph: one full-dim block (full-dim blocks are always layout
        # legal even when not (8,128) aligned).
        n8 = _round_up(n_nodes, 8)
        return n8, n8, 1
    if n_nodes < 1024:
        tile_m, tile_k = 128, 128
    else:
        tile_m = 256 if big_vmem else 128
        tile_k = 512                              # multiple of 128 (v5e MXU)
    num_splits = 2 if n_nodes >= 4 * tile_m else 1   # v7x: 2 TensorCores
    return tile_m, tile_k, num_splits


# --------------------------------------------------------------------------
# Kernel 1: GIN aggregation + MLP + per-graph (un-normalized) pooled sums.
# --------------------------------------------------------------------------
def _gin_pool_kernel(adj_ref, pool_ref, xw1_ref,
                     b1_ref, w2_ref, b2_ref, w3_ref, b3_ref, w4_ref, b4_ref,
                     part_ref, agg_ref):
    i = pl.program_id(1)                 # row tile inside this split
    k = pl.program_id(2)                 # adjacency column (K) tile
    nk = pl.num_programs(2)

    @pl.when((i == 0) & (k == 0))
    def _init_partial():                 # per-split partial pooled sums
        part_ref[...] = jnp.zeros_like(part_ref)

    @pl.when(k == 0)
    def _init_agg():                     # per-row-tile K accumulator
        agg_ref[...] = jnp.zeros_like(agg_ref)

    # (A + (1+eps) I)[rows, kcols] @ (x @ W1)[kcols]  — bf16 MXU, f32 acc.
    agg_ref[...] += jnp.dot(adj_ref[...], xw1_ref[...],
                            preferred_element_type=jnp.float32)

    @pl.when(k == nk - 1)
    def _mlp_and_pool():
        h = agg_ref[...] + b1_ref[...]                     # Linear1 bias
        # Dropout(0.1): identity in eval mode.
        h = jnp.where(h >= 0.0, h, LEAKY_SLOPE * h)        # LeakyReLU(1.5)
        h = jnp.maximum(
            jnp.dot(h.astype(jnp.bfloat16), w2_ref[...],
                    preferred_element_type=jnp.float32) + b2_ref[...], 0.0)
        h = jnp.maximum(
            jnp.dot(h.astype(jnp.bfloat16), w3_ref[...],
                    preferred_element_type=jnp.float32) + b3_ref[...], 0.0)
        h = jnp.dot(h.astype(jnp.bfloat16), w4_ref[...],
                    preferred_element_type=jnp.float32) + b4_ref[...]
        # Un-normalized per-graph sums: bf16 one-hot (exact 0/1) @ h, natural
        # layout (contract over the LHS last dim; no transposed contraction).
        part_ref[...] += jnp.dot(pool_ref[...], h.astype(jnp.bfloat16),
                                 preferred_element_type=jnp.float32)


# --------------------------------------------------------------------------
# Kernel 2: sum partials, divide by counts, final Linear, L2 normalize.
# --------------------------------------------------------------------------
def _finalize_kernel(part_ref, cnt_ref, wl_ref, bl_ref, o_ref):
    pooled = jnp.sum(part_ref[...], axis=0)                # [G, H]
    mean = pooled / cnt_ref[...]                           # global_mean_pool
    out = jnp.dot(mean, wl_ref[...],
                  precision=lax.Precision.HIGHEST,
                  preferred_element_type=jnp.float32) + bl_ref[...]
    ssq = jnp.sum(out * out, axis=1, keepdims=True)
    # out / max(||out||, eps)  ==  out * rsqrt(max(||out||^2, eps^2))
    o_ref[...] = out * lax.rsqrt(jnp.maximum(ssq, NORM_EPS * NORM_EPS))


def subgraph_encoder(x, edge_index, batch, params, num_graphs, *,
                     tile_m=None, tile_k=None, num_splits=None):
    """x: [N, Fin] f32, edge_index: [2, E] i32, batch: [N] i32."""
    n_nodes, in_feats = x.shape
    (w1, b1, w2, b2, w3, b3, w4, b4, wl, bl) = params
    hidden = w1.shape[1]
    out_neurons = wl.shape[1]

    a_tm, a_tk, a_ns = _choose_tiles(n_nodes)
    tile_m = tile_m or a_tm
    tile_k = tile_k or a_tk
    num_splits = num_splits or a_ns
    n_pad = _round_up(n_nodes, math.lcm(tile_m * num_splits, tile_k))

    # Layout legality: blocks must be (8,128)-aligned or equal the full dims.
    assert tile_m % 8 == 0
    assert tile_k % 128 == 0 or tile_k == n_pad
    assert tile_m % 128 == 0 or tile_m == n_pad      # pooling tile lane dim

    # Pad nodes: padded rows have zero features, zero adjacency and batch=-1
    # (zero pooling weight), so they never reach the output.
    if n_pad != n_nodes:
        x = jnp.pad(x, ((0, n_pad - n_nodes), (0, 0)))
        batch = jnp.pad(batch, (0, n_pad - n_nodes), constant_values=-1)

    # Dense adjacency with the GIN self term folded in: A' = A + (1+eps) I.
    # bf16 is exact for edge multiplicities <= 256.
    # TODO(synk): for large sparse graphs, stream CSR edge segments via scalar
    # prefetch instead of materializing the O(N^2) dense adjacency.
    src, dst = edge_index[0], edge_index[1]
    adj = jnp.zeros((n_pad, n_pad), jnp.float32).at[dst, src].add(1.0)
    diag = jnp.arange(n_pad)
    adj = adj.at[diag, diag].add(1.0 + EPS_GIN).astype(jnp.bfloat16)

    # Reassociate (A'x)@W1 == A'@(xW1): precompute xW1 once (f32, HIGHEST),
    # keep it bf16 for the MXU stream.  (Best when hidden <= 128, which is the
    # typical GNN width; always mathematically exact.)
    xw1 = jnp.dot(x, w1, precision=lax.Precision.HIGHEST,
                  preferred_element_type=jnp.float32)
    xw1_bf = xw1.astype(jnp.bfloat16)

    # Pooling one-hot (bf16, exact 0/1) + per-graph node counts (f32).
    onehot = batch[None, :] == jnp.arange(num_graphs, dtype=batch.dtype)[:, None]
    pool = onehot.astype(jnp.bfloat16)                           # [G, N]
    counts = jnp.maximum(jnp.sum(onehot, axis=1).astype(jnp.float32),
                         1.0)[:, None]                           # [G, 1]

    w2b, w3b, w4b = (w.astype(jnp.bfloat16) for w in (w2, w3, w4))

    rows_total = n_pad // tile_m
    rows_per_split = rows_total // num_splits
    k_steps = n_pad // tile_k
    grid = (num_splits, rows_per_split, k_steps)

    res = lambda c, i, k: (0, 0)           # constant-index residents
    in_specs = [
        pl.BlockSpec((tile_m, tile_k),
                     lambda c, i, k: (c * rows_per_split + i, k)),      # A'
        pl.BlockSpec((num_graphs, tile_m),
                     lambda c, i, k: (0, c * rows_per_split + i)),      # pool
        pl.BlockSpec((tile_k, hidden), lambda c, i, k: (k, 0)),         # xW1
        pl.BlockSpec(b1.shape, res, pipeline_mode=pl.Buffered(1)),
        pl.BlockSpec(w2.shape, res, pipeline_mode=pl.Buffered(1)),
        pl.BlockSpec(b2.shape, res, pipeline_mode=pl.Buffered(1)),
        pl.BlockSpec(w3.shape, res, pipeline_mode=pl.Buffered(1)),
        pl.BlockSpec(b3.shape, res, pipeline_mode=pl.Buffered(1)),
        pl.BlockSpec(w4.shape, res, pipeline_mode=pl.Buffered(1)),
        pl.BlockSpec(b4.shape, res, pipeline_mode=pl.Buffered(1)),
    ]
    # Per-split partial pooled sums; block index depends only on the parallel
    # axis, so it acts as a VMEM-resident accumulator across (row, k).
    out_specs = pl.BlockSpec((None, num_graphs, hidden),
                             lambda c, i, k: (c, 0, 0))

    # VMEM budget (residents counted once thanks to Buffered(1)).
    vmem_needed = (
        2 * tile_m * tile_k * 2                      # adjacency tiles (bf16)
        + 2 * num_graphs * tile_m * 2                # pooling tiles   (bf16)
        + 2 * tile_k * hidden * 2                    # xW1 tiles       (bf16)
        + 3 * hidden * hidden * 2 + 4 * hidden * 4   # resident weights/biases
        + 2 * num_graphs * hidden * 4                # output block
        + tile_m * hidden * 4)                       # agg scratch
    vmem_cap = _vmem_capacity_bytes()
    cap = (100 << 20) if vmem_cap >= (100 << 20) else (48 << 20)
    vmem_limit = int(min(max(4 * vmem_needed, 16 << 20), cap))

    flops = (2 * n_pad * n_pad * hidden              # A' @ (xW1)
             + 6 * n_pad * hidden * hidden           # MLP layers 2-4
             + 2 * n_pad * num_graphs * hidden)      # pooling matmul
    bytes_accessed = (n_pad * n_pad * 2
                      + num_graphs * n_pad * 2
                      + rows_total * n_pad * hidden * 2
                      + 3 * hidden * hidden * 2 + 4 * hidden * 4
                      + num_splits * num_graphs * hidden * 4)

    partials = pl.pallas_call(
        _gin_pool_kernel,
        out_shape=jax.ShapeDtypeStruct((num_splits, num_graphs, hidden),
                                       jnp.float32),
        grid_spec=pltpu.PrefetchScalarGridSpec(
            num_scalar_prefetch=0,
            grid=grid,
            in_specs=in_specs,
            out_specs=out_specs,
            scratch_shapes=[pltpu.VMEM((tile_m, hidden), jnp.float32)]),
        compiler_params=pltpu.CompilerParams(
            # splits: disjoint output blocks -> megacore-parallel (v7x);
            # row/K axes reduce into resident accumulators -> sequential.
            dimension_semantics=("parallel", "arbitrary", "arbitrary"),
            vmem_limit_bytes=vmem_limit),
        cost_estimate=pl.CostEstimate(
            flops=int(flops), transcendentals=0,
            bytes_accessed=int(bytes_accessed)),
    )(adj, pool, xw1_bf, b1, w2b, b2, w3b, b3, w4b, b4)

    # Tiny epilogue kernel: mean-pool division, final Linear, L2 normalize.
    return pl.pallas_call(
        _finalize_kernel,
        out_shape=jax.ShapeDtypeStruct((num_graphs, out_neurons), jnp.float32),
    )(partials, counts, wl, bl)


def init_params(key, in_neurons, hidden_neurons, output_neurons):
    """Deterministic synthetic parameters.  Weights stored as [in, out]."""
    ks = jax.random.split(key, 10)

    def lin(kw, kb, fan_in, fan_out):
        scale = 1.0 / jnp.sqrt(jnp.float32(fan_in))
        w = jax.random.uniform(kw, (fan_in, fan_out), jnp.float32, -scale, scale)
        b = jax.random.uniform(kb, (1, fan_out), jnp.float32, -scale, scale)
        return w, b

    w1, b1 = lin(ks[0], ks[1], in_neurons, hidden_neurons)
    w2, b2 = lin(ks[2], ks[3], hidden_neurons, hidden_neurons)
    w3, b3 = lin(ks[4], ks[5], hidden_neurons, hidden_neurons)
    w4, b4 = lin(ks[6], ks[7], hidden_neurons, hidden_neurons)
    wl, bl = lin(ks[8], ks[9], hidden_neurons, output_neurons)
    return (w1, b1, w2, b2, w3, b3, w4, b4, wl, bl)


if __name__ == "__main__":
    # Small, GNN-appropriate shapes.
    N_NODES = 512
    N_EDGES = 2048
    IN_NEURONS = 16
    HIDDEN_NEURONS = 32
    OUTPUT_NEURONS = 8
    NUM_GRAPHS = 4

    key = jax.random.PRNGKey(0)
    kx, ke1, ke2, kp = jax.random.split(key, 4)

    x = jax.random.normal(kx, (N_NODES, IN_NEURONS), jnp.float32)
    src = jax.random.randint(ke1, (N_EDGES,), 0, N_NODES, dtype=jnp.int32)
    dst = jax.random.randint(ke2, (N_EDGES,), 0, N_NODES, dtype=jnp.int32)
    edge_index = jnp.stack([src, dst], axis=0)                       # [2, E]
    batch = jnp.repeat(jnp.arange(NUM_GRAPHS, dtype=jnp.int32),
                       N_NODES // NUM_GRAPHS)                        # [N]

    params = init_params(kp, IN_NEURONS, HIDDEN_NEURONS, OUTPUT_NEURONS)

    # tile_m=128 / tile_k=256 / num_splits=2 -> grid (2, 2, 2): exercises the
    # parallel split, the multi-row pooled accumulation and the K-tiled
    # adjacency reduction.
    out = subgraph_encoder(x, edge_index, batch, params, NUM_GRAPHS,
                           tile_m=128, tile_k=256, num_splits=2)
    jax.block_until_ready(out)
    assert out.shape == (NUM_GRAPHS, OUTPUT_NEURONS)
    assert bool(jnp.all(jnp.isfinite(out)))
    print("KERNEL_OK")
</pallas_src>

<mosaic_0001>
module attributes {stable_mosaic.version = 11 : i64} {
  func.func @_gin_pool_kernel(%arg0: i32, %arg1: i32, %arg2: i32, %arg3: memref<128x256xbf16, #tpu.memory_space<vmem>>, %arg4: memref<4x128xbf16, #tpu.memory_space<vmem>>, %arg5: memref<256x32xbf16, #tpu.memory_space<vmem>>, %arg6: memref<1x32xf32, #tpu.memory_space<vmem>>, %arg7: memref<32x32xbf16, #tpu.memory_space<vmem>>, %arg8: memref<1x32xf32, #tpu.memory_space<vmem>>, %arg9: memref<32x32xbf16, #tpu.memory_space<vmem>>, %arg10: memref<1x32xf32, #tpu.memory_space<vmem>>, %arg11: memref<32x32xbf16, #tpu.memory_space<vmem>>, %arg12: memref<1x32xf32, #tpu.memory_space<vmem>>, %arg13: memref<1x4x32xf32, #tpu.memory_space<vmem>>, %arg14: memref<128x32xf32, #tpu.memory_space<vmem>>) attributes {dimension_semantics = [#tpu.dimension_semantics<parallel>, #tpu.dimension_semantics<arbitrary>, #tpu.dimension_semantics<arbitrary>], iteration_bounds = array<i64: 2, 2, 2>, scalar_prefetch = 0 : i64, scratch_operands = 1 : i64, tpu.core_type = #tpu.core_type<tc>, window_params = [{transform_indices = @transform_0, window_bounds = array<i64: 128, 256>}, {transform_indices = @transform_1, window_bounds = array<i64: 4, 128>}, {transform_indices = @transform_2, window_bounds = array<i64: 256, 32>}, {pipeline_mode = #tpu.pipeline_mode<synchronous>, transform_indices = @transform_3, window_bounds = array<i64: 1, 32>}, {pipeline_mode = #tpu.pipeline_mode<synchronous>, transform_indices = @transform_4, window_bounds = array<i64: 32, 32>}, {pipeline_mode = #tpu.pipeline_mode<synchronous>, transform_indices = @transform_5, window_bounds = array<i64: 1, 32>}, {pipeline_mode = #tpu.pipeline_mode<synchronous>, transform_indices = @transform_6, window_bounds = array<i64: 32, 32>}, {pipeline_mode = #tpu.pipeline_mode<synchronous>, transform_indices = @transform_7, window_bounds = array<i64: 1, 32>}, {pipeline_mode = #tpu.pipeline_mode<synchronous>, transform_indices = @transform_8, window_bounds = array<i64: 32, 32>}, {pipeline_mode = #tpu.pipeline_mode<synchronous>, transform_indices = @transform_9, window_bounds = array<i64: 1, 32>}, {transform_indices = @transform_10, window_bounds = array<i64: 1, 4, 32>}]} {
    %c0_i32 = arith.constant 0 : i32
    %0 = arith.cmpi eq, %arg1, %c0_i32 : i32
    %c0_i32_0 = arith.constant 0 : i32
    %1 = arith.cmpi eq, %arg2, %c0_i32_0 : i32
    %2 = arith.andi %0, %1 : i1
    %3 = arith.extui %2 : i1 to i32
    %c0_i32_1 = arith.constant 0 : i32
    %4 = arith.cmpi ne, %3, %c0_i32_1 : i32
    scf.if %4 {
      %cst_12 = arith.constant 0.000000e+00 : f32
      %17 = vector.broadcast %cst_12 : f32 to vector<4x32xf32>
      %c0_13 = arith.constant 0 : index
      %c0_14 = arith.constant 0 : index
      %c0_15 = arith.constant 0 : index
      %18 = vector.load %arg13[%c0_13, %c0_14, %c0_15] : memref<1x4x32xf32, #tpu.memory_space<vmem>>, vector<1x4x32xf32>
      %19 = vector.shape_cast %18 : vector<1x4x32xf32> to vector<4x32xf32>
      %20 = vector.shape_cast %17 : vector<4x32xf32> to vector<1x4x32xf32>
      tpu.vector_store %arg13[%c0_13, %c0_14, %c0_15], %20 {strides = array<i32>} : memref<1x4x32xf32, #tpu.memory_space<vmem>>, vector<1x4x32xf32>,
    } else {
    }
    %c0_i32_2 = arith.constant 0 : i32
    %5 = arith.cmpi eq, %arg2, %c0_i32_2 : i32
    %6 = arith.extui %5 : i1 to i32
    %c0_i32_3 = arith.constant 0 : i32
    %7 = arith.cmpi ne, %6, %c0_i32_3 : i32
    scf.if %7 {
      %cst_12 = arith.constant 0.000000e+00 : f32
      %17 = vector.broadcast %cst_12 : f32 to vector<128x32xf32>
      %c0_13 = arith.constant 0 : index
      %c0_14 = arith.constant 0 : index
      %18 = vector.load %arg14[%c0_13, %c0_14] : memref<128x32xf32, #tpu.memory_space<vmem>>, vector<128x32xf32>
      tpu.vector_store %arg14[%c0_13, %c0_14], %17 {strides = array<i32>} : memref<128x32xf32, #tpu.memory_space<vmem>>, vector<128x32xf32>,
    } else {
    }
    %c0 = arith.constant 0 : index
    %c0_4 = arith.constant 0 : index
    %8 = vector.load %arg14[%c0, %c0_4] : memref<128x32xf32, #tpu.memory_space<vmem>>, vector<128x32xf32>
    %c0_5 = arith.constant 0 : index
    %c0_6 = arith.constant 0 : index
    %9 = vector.load %arg3[%c0_5, %c0_6] : memref<128x256xbf16, #tpu.memory_space<vmem>>, vector<128x256xbf16>
    %c0_7 = arith.constant 0 : index
    %c0_8 = arith.constant 0 : index
    %10 = vector.load %arg5[%c0_7, %c0_8] : memref<256x32xbf16, #tpu.memory_space<vmem>>, vector<256x32xbf16>
    %cst = arith.constant dense<0.000000e+00> : vector<128x32xf32>
    %11 = tpu.matmul %9, %10, %cst {dimension_numbers = #tpu.dot_dimension_numbers<[1], [0], [0], [1], [0, 0, 1, 1], [], []>} : vector<128x256xbf16>, vector<256x32xbf16>, vector<128x32xf32> -> vector<128x32xf32>
    %12 = arith.addf %8, %11 : vector<128x32xf32>
    %c0_9 = arith.constant 0 : index
    %c0_10 = arith.constant 0 : index
    %13 = vector.load %arg14[%c0_9, %c0_10] : memref<128x32xf32, #tpu.memory_space<vmem>>, vector<128x32xf32>
    tpu.vector_store %arg14[%c0_9, %c0_10], %12 {strides = array<i32>} : memref<128x32xf32, #tpu.memory_space<vmem>>, vector<128x32xf32>,
    %c1_i32 = arith.constant 1 : i32
    %14 = arith.cmpi eq, %arg2, %c1_i32 : i32
    %15 = arith.extui %14 : i1 to i32
    %c0_i32_11 = arith.constant 0 : i32
    %16 = arith.cmpi ne, %15, %c0_i32_11 : i32
    scf.if %16 {
      %c0_12 = arith.constant 0 : index
      %c0_13 = arith.constant 0 : index
      %17 = vector.load %arg14[%c0_12, %c0_13] : memref<128x32xf32, #tpu.memory_space<vmem>>, vector<128x32xf32>
      %c0_14 = arith.constant 0 : index
      %c0_15 = arith.constant 0 : index
      %18 = vector.load %arg6[%c0_14, %c0_15] : memref<1x32xf32, #tpu.memory_space<vmem>>, vector<1x32xf32>
      %19 = vector.broadcast %18 : vector<1x32xf32> to vector<128x32xf32>
      %20 = arith.addf %17, %19 : vector<128x32xf32>
      %cst_16 = arith.constant 0.000000e+00 : f32
      %21 = vector.broadcast %cst_16 : f32 to vector<128x32xf32>
      %22 = arith.cmpf oge, %20, %21 : vector<128x32xf32>
      %cst_17 = arith.constant 1.500000e+00 : f32
      %23 = vector.broadcast %cst_17 : f32 to vector<128x32xf32>
      %24 = arith.mulf %23, %20 : vector<128x32xf32>
      %25 = arith.select %22, %20, %24 : vector<128x32xi1>, vector<128x32xf32>
      %26 = arith.truncf %25 : vector<128x32xf32> to vector<128x32xbf16>
      %c0_18 = arith.constant 0 : index
      %c0_19 = arith.constant 0 : index
      %27 = vector.load %arg7[%c0_18, %c0_19] : memref<32x32xbf16, #tpu.memory_space<vmem>>, vector<32x32xbf16>
      %cst_20 = arith.constant dense<0.000000e+00> : vector<128x32xf32>
      %28 = tpu.matmul %26, %27, %cst_20 {dimension_numbers = #tpu.dot_dimension_numbers<[1], [0], [0], [1], [0, 0, 1, 1], [], []>} : vector<128x32xbf16>, vector<32x32xbf16>, vector<128x32xf32> -> vector<128x32xf32>
      %c0_21 = arith.constant 0 : index
      %c0_22 = arith.constant 0 : index
      %29 = vector.load %arg8[%c0_21, %c0_22] : memref<1x32xf32, #tpu.memory_space<vmem>>, vector<1x32xf32>
      %30 = vector.broadcast %29 : vector<1x32xf32> to vector<128x32xf32>
      %31 = arith.addf %28, %30 : vector<128x32xf32>
      %cst_23 = arith.constant 0.000000e+00 : f32
      %32 = vector.broadcast %cst_23 : f32 to vector<128x32xf32>
      %33 = arith.maximumf %31, %32 : vector<128x32xf32>
      %34 = arith.truncf %33 : vector<128x32xf32> to vector<128x32xbf16>
      %c0_24 = arith.constant 0 : index
      %c0_25 = arith.constant 0 : index
      %35 = vector.load %arg9[%c0_24, %c0_25] : memref<32x32xbf16, #tpu.memory_space<vmem>>, vector<32x32xbf16>
      %cst_26 = arith.constant dense<0.000000e+00> : vector<128x32xf32>
      %36 = tpu.matmul %34, %35, %cst_26 {dimension_numbers = #tpu.dot_dimension_numbers<[1], [0], [0], [1], [0, 0, 1, 1], [], []>} : vector<128x32xbf16>, vector<32x32xbf16>, vector<128x32xf32> -> vector<128x32xf32>
      %c0_27 = arith.constant 0 : index
      %c0_28 = arith.constant 0 : index
      %37 = vector.load %arg10[%c0_27, %c0_28] : memref<1x32xf32, #tpu.memory_space<vmem>>, vector<1x32xf32>
      %38 = vector.broadcast %37 : vector<1x32xf32> to vector<128x32xf32>
      %39 = arith.addf %36, %38 : vector<128x32xf32>
      %cst_29 = arith.constant 0.000000e+00 : f32
      %40 = vector.broadcast %cst_29 : f32 to vector<128x32xf32>
      %41 = arith.maximumf %39, %40 : vector<128x32xf32>
      %42 = arith.truncf %41 : vector<128x32xf32> to vector<128x32xbf16>
      %c0_30 = arith.constant 0 : index
      %c0_31 = arith.constant 0 : index
      %43 = vector.load %arg11[%c0_30, %c0_31] : memref<32x32xbf16, #tpu.memory_space<vmem>>, vector<32x32xbf16>
      %cst_32 = arith.constant dense<0.000000e+00> : vector<128x32xf32>
      %44 = tpu.matmul %42, %43, %cst_32 {dimension_numbers = #tpu.dot_dimension_numbers<[1], [0], [0], [1], [0, 0, 1, 1], [], []>} : vector<128x32xbf16>, vector<32x32xbf16>, vector<128x32xf32> -> vector<128x32xf32>
      %c0_33 = arith.constant 0 : index
      %c0_34 = arith.constant 0 : index
      %45 = vector.load %arg12[%c0_33, %c0_34] : memref<1x32xf32, #tpu.memory_space<vmem>>, vector<1x32xf32>
      %46 = vector.broadcast %45 : vector<1x32xf32> to vector<128x32xf32>
      %47 = arith.addf %44, %46 : vector<128x32xf32>
      %c0_35 = arith.constant 0 : index
      %c0_36 = arith.constant 0 : index
      %c0_37 = arith.constant 0 : index
      %48 = vector.load %arg13[%c0_35, %c0_36, %c0_37] : memref<1x4x32xf32, #tpu.memory_space<vmem>>, vector<1x4x32xf32>
      %49 = vector.shape_cast %48 : vector<1x4x32xf32> to vector<4x32xf32>
      %c0_38 = arith.constant 0 : index
      %c0_39 = arith.constant 0 : index
      %50 = vector.load %arg4[%c0_38, %c0_39] : memref<4x128xbf16, #tpu.memory_space<vmem>>, vector<4x128xbf16>
      %51 = arith.truncf %47 : vector<128x32xf32> to vector<128x32xbf16>
      %cst_40 = arith.constant dense<0.000000e+00> : vector<4x32xf32>
      %52 = tpu.matmul %50, %51, %cst_40 {dimension_numbers = #tpu.dot_dimension_numbers<[1], [0], [0], [1], [0, 0, 1, 1], [], []>} : vector<4x128xbf16>, vector<128x32xbf16>, vector<4x32xf32> -> vector<4x32xf32>
      %53 = arith.addf %49, %52 : vector<4x32xf32>
      %c0_41 = arith.constant 0 : index
      %c0_42 = arith.constant 0 : index
      %c0_43 = arith.constant 0 : index
      %54 = vector.load %arg13[%c0_41, %c0_42, %c0_43] : memref<1x4x32xf32, #tpu.memory_space<vmem>>, vector<1x4x32xf32>
      %55 = vector.shape_cast %54 : vector<1x4x32xf32> to vector<4x32xf32>
      %56 = vector.shape_cast %53 : vector<4x32xf32> to vector<1x4x32xf32>
      tpu.vector_store %arg13[%c0_41, %c0_42, %c0_43], %56 {strides = array<i32>} : memref<1x4x32xf32, #tpu.memory_space<vmem>>, vector<1x4x32xf32>,
    } else {
    }
    return
  }
  func.func @transform_0(%arg0: i32, %arg1: i32, %arg2: i32) -> (i32, i32) {
    %c2_i32 = arith.constant 2 : i32
    %0 = arith.muli %arg0, %c2_i32 : i32
    %1 = arith.addi %0, %arg1 : i32
    %c0_i32 = arith.constant 0 : i32
    return %1, %arg2 : i32, i32
  }
  func.func @transform_1(%arg0: i32, %arg1: i32, %arg2: i32) -> (i32, i32) {
    %c2_i32 = arith.constant 2 : i32
    %0 = arith.muli %arg0, %c2_i32 : i32
    %1 = arith.addi %0, %arg1 : i32
    %c0_i32 = arith.constant 0 : i32
    %c0_i32_0 = arith.constant 0 : i32
    return %c0_i32, %1 : i32, i32
  }
  func.func @transform_2(%arg0: i32, %arg1: i32, %arg2: i32) -> (i32, i32) {
    %c0_i32 = arith.constant 0 : i32
    %c0_i32_0 = arith.constant 0 : i32
    return %arg2, %c0_i32 : i32, i32
  }
  func.func @transform_3(%arg0: i32, %arg1: i32, %arg2: i32) -> (i32, i32) {
    %c0_i32 = arith.constant 0 : i32
    %c0_i32_0 = arith.constant 0 : i32
    %c0_i32_1 = arith.constant 0 : i32
    return %c0_i32, %c0_i32_0 : i32, i32
  }
  func.func @transform_4(%arg0: i32, %arg1: i32, %arg2: i32) -> (i32, i32) {
    %c0_i32 = arith.constant 0 : i32
    %c0_i32_0 = arith.constant 0 : i32
    %c0_i32_1 = arith.constant 0 : i32
    return %c0_i32, %c0_i32_0 : i32, i32
  }
  func.func @transform_5(%arg0: i32, %arg1: i32, %arg2: i32) -> (i32, i32) {
    %c0_i32 = arith.constant 0 : i32
    %c0_i32_0 = arith.constant 0 : i32
    %c0_i32_1 = arith.constant 0 : i32
    return %c0_i32, %c0_i32_0 : i32, i32
  }
  func.func @transform_6(%arg0: i32, %arg1: i32, %arg2: i32) -> (i32, i32) {
    %c0_i32 = arith.constant 0 : i32
    %c0_i32_0 = arith.constant 0 : i32
    %c0_i32_1 = arith.constant 0 : i32
    return %c0_i32, %c0_i32_0 : i32, i32
  }
  func.func @transform_7(%arg0: i32, %arg1: i32, %arg2: i32) -> (i32, i32) {
    %c0_i32 = arith.constant 0 : i32
    %c0_i32_0 = arith.constant 0 : i32
    %c0_i32_1 = arith.constant 0 : i32
    return %c0_i32, %c0_i32_0 : i32, i32
  }
  func.func @transform_8(%arg0: i32, %arg1: i32, %arg2: i32) -> (i32, i32) {
    %c0_i32 = arith.constant 0 : i32
    %c0_i32_0 = arith.constant 0 : i32
    %c0_i32_1 = arith.constant 0 : i32
    return %c0_i32, %c0_i32_0 : i32, i32
  }
  func.func @transform_9(%arg0: i32, %arg1: i32, %arg2: i32) -> (i32, i32) {
    %c0_i32 = arith.constant 0 : i32
    %c0_i32_0 = arith.constant 0 : i32
    %c0_i32_1 = arith.constant 0 : i32
    return %c0_i32, %c0_i32_0 : i32, i32
  }
  func.func @transform_10(%arg0: i32, %arg1: i32, %arg2: i32) -> (i32, i32, i32) {
    %c0_i32 = arith.constant 0 : i32
    %c0_i32_0 = arith.constant 0 : i32
    %c0_i32_1 = arith.constant 0 : i32
    return %arg0, %c0_i32, %c0_i32_0 : i32, i32, i32
  }
}

</mosaic_0001>

<llo_original>
// kernel: tpu_custom_call.1
$region0: #{tpu_custom_call.1}
  #allocation0 [shape = 'u32[]', space=smem, size = 0x4, offset = 0x4, fixed_abs, tag = 'smem constant byte address 0x4 - core index']
  #allocation1 [shape = 'u32[72,128]{1,0:T(1,128)}', space=vmem, size = 0x9000, scoped, tag = 'internal scratch']
  #allocation2 [shape = 'f32[128,32]{1,0:T(8,128)}', space=vmem, size = 0x10000, scoped, tag = 'scratch operand']
  %s0 = inlined_call_operand.hbm [shape: bf16[512,512], index: 0, kind: input, shape index: {}]
  %s1 = inlined_call_operand.vmem [shape: bf16[4,512], index: 1, kind: input, shape index: {}]
  %s2 = inlined_call_operand.vmem [shape: bf16[512,32], index: 2, kind: input, shape index: {}]
  %s3 = inlined_call_operand.vmem [shape: f32[1,32], index: 3, kind: input, shape index: {}]
  %s4 = inlined_call_operand.vmem [shape: bf16[32,32], index: 4, kind: input, shape index: {}]
  %s5 = inlined_call_operand.vmem [shape: f32[1,32], index: 5, kind: input, shape index: {}]
  %s6 = inlined_call_operand.vmem [shape: bf16[32,32], index: 6, kind: input, shape index: {}]
  %s7 = inlined_call_operand.vmem [shape: f32[1,32], index: 7, kind: input, shape index: {}]
  %s8 = inlined_call_operand.vmem [shape: bf16[32,32], index: 8, kind: input, shape index: {}]
  %s9 = inlined_call_operand.vmem [shape: f32[1,32], index: 9, kind: input, shape index: {}]
  %s10 = inlined_call_operand.hbm [shape: f32[2,4,32], index: 10, kind: output, shape index: {}]
  %s11 = sld [smem:[#allocation0]]
  $region89: #{tpu_custom_call.1} parent=0
    _
  %s13 = ssub.s32 1, %s11
  %s14 = scalar_select 0, %s13, %s11
  $region1: #{tpu_custom_call.1} parent=0
    #allocation3 [shape = 'u8[131072]{0}', space=vmem, size = 0x20000, scoped, tag = 'input window, operand 0']
    #allocation4 [shape = 's32[2]{0}', space=sflag, size = 0x8, scoped, tag = 'scoped memory for tpu_custom_call.1']
    #allocation5 [shape = 's32[2]{0}', space=sflag, size = 0x8, scoped, tag = 'scoped memory for tpu_custom_call.1']
    #allocation6 [shape = 'u8[4096]{0}', space=vmem, size = 0x1000, scoped, tag = 'output window, operand 0']
    %15 = vsyncpa [#allocation4], 0
    %s16 = scalar_lea.sflag [#allocation4], 1
    %17 = vsyncpa %s16, 0
    %18 = vsyncpa [#allocation5], 0
    %s19 = scalar_lea.sflag [#allocation5], 1
    %20 = vsyncpa %s19, 0
    loop: start=0, step=1, limit=10
    $region2: #{tpu_custom_call.1} parent=1 // loop_pre_header
      _
    $region3: #{tpu_custom_call.1} parent=1 // loop_header
      %s22 = sphi 0, %s26
      %p23 = scmp.ge.s32.totalorder %s22, 10
      %s29 = sphi 0, %s48
      %s30 = sphi 0, %s44
      %s31 = sphi 0, %s40
      %s32 = sphi 0, %s29
      %s33 = sphi 0, %s30
      %s34 = sphi 0, %s31
      %s35 = sphi 0, %s32
      %s36 = sphi 0, %s33
      %s37 = sphi 0, %s34
      %s57 = sphi 0, %s59
      %s60 = sphi 0, %s57
      %s61 = sphi 0, %s60
      %s77 = sphi 0, %s61
      %s87 = sphi 0, %s89
      %s90 = sphi 0, %s87
      %s91 = sphi 0, %s90
      %s107 = sphi 0, %s91
      %s113 = sphi 0, %s115
      %s116 = sphi 0, %s113
      %s117 = sphi 0, %s116
      %s133 = sphi 0, %s117
      %s137 = sphi 0, %s137
      %s139 = sphi 0, %s137
      %s140 = sphi 0, %s139
      %s154 = sphi 0, %s140
      %s158 = sphi 0, %s158
      %s160 = sphi 0, %s158
      %s161 = sphi 0, %s160
      %s175 = sphi 0, %s161
      %s179 = sphi 0, %s179
      %s181 = sphi 0, %s179
      %s182 = sphi 0, %s181
      %s196 = sphi 0, %s182
      %s200 = sphi 0, %s200
      %s202 = sphi 0, %s200
      %s203 = sphi 0, %s202
      %s217 = sphi 0, %s203
      %s221 = sphi 0, %s221
      %s223 = sphi 0, %s221
      %s224 = sphi 0, %s223
      %s238 = sphi 0, %s224
      %s242 = sphi 0, %s242
      %s244 = sphi 0, %s242
      %s245 = sphi 0, %s244
      %s259 = sphi 0, %s245
      %s263 = sphi 0, %s263
      %s265 = sphi 0, %s263
      %s266 = sphi 0, %s265
      %s280 = sphi 0, %s266
      %s286 = sphi 0, %s288
      %s289 = sphi 0, %s286
      %s290 = sphi 0, %s289
      %s306 = sphi 0, %s290
    $region4: #{tpu_custom_call.1} parent=1 // loop_header_branch
      %25 = sbr.rel (%p23) target = $region8
    $region5: #{tpu_custom_call.1} parent=1 // loop_body
      %s27 = ssub.s32 %s22, 1
      %s28 = ssub.s32 %s22, 2
      %s38 = sadd.s32 1, %s31
      %p39 = scmp.ge.s32.totalorder %s38, 2
      %s40 = scalar_select %p39, 0, %s38
      %s41 = sadd.s32 1, %s30
      %s42 = scalar_select %p39, %s41, %s30
      %p43 = scmp.ge.s32.totalorder %s42, 2
      %s44 = scalar_select %p43, 0, %s42
      %s45 = sadd.s32 1, %s29
      %s46 = scalar_select %p43, %s45, %s29
      %p47 = scmp.ge.s32.totalorder %s46, 2
      %s48 = scalar_select %p47, 0, %s46
      %s49 = smul.u32 %s29, 2
      %s50 = sadd.s32 %s49, %s30
      %s51 = smul.u32 %s48, 2
      %s52 = sadd.s32 %s51, %s44
      %s53 = ssub.s32 %s50, %s52
      %s54 = ssub.s32 %s31, %s40
      %s55 = sor.u32 %s53, %s54
      %p56 = scmp.eq.s32.totalorder %s55, 0
      %s58 = sadd.s32 %s57, 1
      %s59 = scalar_select %p56, %s57, %s58
      %p62 = pneg %p56
      %p63 = scmp.eq.s32.totalorder %s22, 7
      %p64 = por %p62, %p63
      %p65 = scmp.ne.s32.totalorder %s57, %s60
      %p66 = scmp.eq.s32.totalorder %s22, 0
      %p67 = por %p65, %p66
      %p68 = scmp.ne.s32.totalorder %s57, %s60
      %p69 = scmp.eq.s32.totalorder %s27, 7
      %p70 = por %p68, %p69
      %p71 = scmp.ne.s32.totalorder %s60, %s61
      %p72 = scmp.eq.s32.totalorder %s27, 0
      %p73 = por %p71, %p72
      %p74 = scmp.ne.s32.totalorder %s60, %s61
      %p75 = scmp.eq.s32.totalorder %s28, 7
      %p76 = por %p74, %p75
      %p78 = scmp.ne.s32.totalorder %s61, %s77
      %p79 = scmp.eq.s32.totalorder %s28, 0
      %p80 = por %p78, %p79
      %s81 = smul.u32 %s29, 2
      %s82 = sadd.s32 %s81, %s30
      %s83 = smul.u32 %s48, 2
      %s84 = sadd.s32 %s83, %s44
      %s85 = ssub.s32 %s82, %s84
      %p86 = scmp.eq.s32.totalorder %s85, 0
      %s88 = sadd.s32 %s87, 1
      %s89 = scalar_select %p86, %s87, %s88
      %p92 = pneg %p86
      %p93 = scmp.eq.s32.totalorder %s22, 7
      %p94 = por %p92, %p93
      %p95 = scmp.ne.s32.totalorder %s87, %s90
      %p96 = scmp.eq.s32.totalorder %s22, 0
      %p97 = por %p95, %p96
      %p98 = scmp.ne.s32.totalorder %s87, %s90
      %p99 = scmp.eq.s32.totalorder %s27, 7
      %p100 = por %p98, %p99
      %p101 = scmp.ne.s32.totalorder %s90, %s91
      %p102 = scmp.eq.s32.totalorder %s27, 0
      %p103 = por %p101, %p102
      %p104 = scmp.ne.s32.totalorder %s90, %s91
      %p105 = scmp.eq.s32.totalorder %s28, 7
      %p106 = por %p104, %p105
      %p108 = scmp.ne.s32.totalorder %s91, %s107
      %p109 = scmp.eq.s32.totalorder %s28, 0
      %p110 = por %p108, %p109
      %s111 = ssub.s32 %s31, %s40
      %p112 = scmp.eq.s32.totalorder %s111, 0
      %s114 = sadd.s32 %s113, 1
      %s115 = scalar_select %p112, %s113, %s114
      %p118 = pneg %p112
      %p119 = scmp.eq.s32.totalorder %s22, 7
      %p120 = por %p118, %p119
      %p121 = scmp.ne.s32.totalorder %s113, %s116
      %p122 = scmp.eq.s32.totalorder %s22, 0
      %p123 = por %p121, %p122
      %p124 = scmp.ne.s32.totalorder %s113, %s116
      %p125 = scmp.eq.s32.totalorder %s27, 7
      %p126 = por %p124, %p125
      %p127 = scmp.ne.s32.totalorder %s116, %s117
      %p128 = scmp.eq.s32.totalorder %s27, 0
      %p129 = por %p127, %p128
      %p130 = scmp.ne.s32.totalorder %s116, %s117
      %p131 = scmp.eq.s32.totalorder %s28, 7
      %p132 = por %p130, %p131
      %p134 = scmp.ne.s32.totalorder %s117, %s133
      %p135 = scmp.eq.s32.totalorder %s28, 0
      %p136 = por %p134, %p135
      %s138 = sadd.s32 %s137, 1
      %p141 = scmp.eq.s32.totalorder %s22, 7
      %p142 = scmp.ne.s32.totalorder %s137, %s139
      %p143 = scmp.eq.s32.totalorder %s22, 0
      %p144 = por %p142, %p143
      %p145 = scmp.ne.s32.totalorder %s137, %s139
      %p146 = scmp.eq.s32.totalorder %s27, 7
      %p147 = por %p145, %p146
      %p148 = scmp.ne.s32.totalorder %s139, %s140
      %p149 = scmp.eq.s32.totalorder %s27, 0
      %p150 = por %p148, %p149
      %p151 = scmp.ne.s32.totalorder %s139, %s140
      %p152 = scmp.eq.s32.totalorder %s28, 7
      %p153 = por %p151, %p152
      %p155 = scmp.ne.s32.totalorder %s140, %s154
      %p156 = scmp.eq.s32.totalorder %s28, 0
      %p157 = por %p155, %p156
      %s159 = sadd.s32 %s158, 1
      %p162 = scmp.eq.s32.totalorder %s22, 7
      %p163 = scmp.ne.s32.totalorder %s158, %s160
      %p164 = scmp.eq.s32.totalorder %s22, 0
      %p165 = por %p163, %p164
      %p166 = scmp.ne.s32.totalorder %s158, %s160
      %p167 = scmp.eq.s32.totalorder %s27, 7
      %p168 = por %p166, %p167
      %p169 = scmp.ne.s32.totalorder %s160, %s161
      %p170 = scmp.eq.s32.totalorder %s27, 0
      %p171 = por %p169, %p170
      %p172 = scmp.ne.s32.totalorder %s160, %s161
      %p173 = scmp.eq.s32.totalorder %s28, 7
      %p174 = por %p172, %p173
      %p176 = scmp.ne.s32.totalorder %s161, %s175
      %p177 = scmp.eq.s32.totalorder %s28, 0
      %p178 = por %p176, %p177
      %s180 = sadd.s32 %s179, 1
      %p183 = scmp.eq.s32.totalorder %s22, 7
      %p184 = scmp.ne.s32.totalorder %s179, %s181
      %p185 = scmp.eq.s32.totalorder %s22, 0
      %p186 = por %p184, %p185
      %p187 = scmp.ne.s32.totalorder %s179, %s181
      %p188 = scmp.eq.s32.totalorder %s27, 7
      %p189 = por %p187, %p188
      %p190 = scmp.ne.s32.totalorder %s181, %s182
      %p191 = scmp.eq.s32.totalorder %s27, 0
      %p192 = por %p190, %p191
      %p193 = scmp.ne.s32.totalorder %s181, %s182
      %p194 = scmp.eq.s32.totalorder %s28, 7
      %p195 = por %p193, %p194
      %p197 = scmp.ne.s32.totalorder %s182, %s196
      %p198 = scmp.eq.s32.totalorder %s28, 0
      %p199 = por %p197, %p198
      %s201 = sadd.s32 %s200, 1
      %p204 = scmp.eq.s32.totalorder %s22, 7
      %p205 = scmp.ne.s32.totalorder %s200, %s202
      %p206 = scmp.eq.s32.totalorder %s22, 0
      %p207 = por %p205, %p206
      %p208 = scmp.ne.s32.totalorder %s200, %s202
      %p209 = scmp.eq.s32.totalorder %s27, 7
      %p210 = por %p208, %p209
      %p211 = scmp.ne.s32.totalorder %s202, %s203
      %p212 = scmp.eq.s32.totalorder %s27, 0
      %p213 = por %p211, %p212
      %p214 = scmp.ne.s32.totalorder %s202, %s203
      %p215 = scmp.eq.s32.totalorder %s28, 7
      %p216 = por %p214, %p215
      %p218 = scmp.ne.s32.totalorder %s203, %s217
      %p219 = scmp.eq.s32.totalorder %s28, 0
      %p220 = por %p218, %p219
      %s222 = sadd.s32 %s221, 1
      %p225 = scmp.eq.s32.totalorder %s22, 7
      %p226 = scmp.ne.s32.totalorder %s221, %s223
      %p227 = scmp.eq.s32.totalorder %s22, 0
      %p228 = por %p226, %p227
      %p229 = scmp.ne.s32.totalorder %s221, %s223
      %p230 = scmp.eq.s32.totalorder %s27, 7
      %p231 = por %p229, %p230
      %p232 = scmp.ne.s32.totalorder %s223, %s224
      %p233 = scmp.eq.s32.totalorder %s27, 0
      %p234 = por %p232, %p233
      %p235 = scmp.ne.s32.totalorder %s223, %s224
      %p236 = scmp.eq.s32.totalorder %s28, 7
      %p237 = por %p235, %p236
      %p239 = scmp.ne.s32.totalorder %s224, %s238
      %p240 = scmp.eq.s32.totalorder %s28, 0
      %p241 = por %p239, %p240
      %s243 = sadd.s32 %s242, 1
      %p246 = scmp.eq.s32.totalorder %s22, 7
      %p247 = scmp.ne.s32.totalorder %s242, %s244
      %p248 = scmp.eq.s32.totalorder %s22, 0
      %p249 = por %p247, %p248
      %p250 = scmp.ne.s32.totalorder %s242, %s244
      %p251 = scmp.eq.s32.totalorder %s27, 7
      %p252 = por %p250, %p251
      %p253 = scmp.ne.s32.totalorder %s244, %s245
      %p254 = scmp.eq.s32.totalorder %s27, 0
      %p255 = por %p253, %p254
      %p256 = scmp.ne.s32.totalorder %s244, %s245
      %p257 = scmp.eq.s32.totalorder %s28, 7
      %p258 = por %p256, %p257
      %p260 = scmp.ne.s32.totalorder %s245, %s259
      %p261 = scmp.eq.s32.totalorder %s28, 0
      %p262 = por %p260, %p261
      %s264 = sadd.s32 %s263, 1
      %p267 = scmp.eq.s32.totalorder %s22, 7
      %p268 = scmp.ne.s32.totalorder %s263, %s265
      %p269 = scmp.eq.s32.totalorder %s22, 0
      %p270 = por %p268, %p269
      %p271 = scmp.ne.s32.totalorder %s263, %s265
      %p272 = scmp.eq.s32.totalorder %s27, 7
      %p273 = por %p271, %p272
      %p274 = scmp.ne.s32.totalorder %s265, %s266
      %p275 = scmp.eq.s32.totalorder %s27, 0
      %p276 = por %p274, %p275
      %p277 = scmp.ne.s32.totalorder %s265, %s266
      %p278 = scmp.eq.s32.totalorder %s28, 7
      %p279 = por %p277, %p278
      %p281 = scmp.ne.s32.totalorder %s266, %s280
      %p282 = scmp.eq.s32.totalorder %s28, 0
      %p283 = por %p281, %p282
      %s284 = ssub.s32 %s29, %s48
      %p285 = scmp.eq.s32.totalorder %s284, 0
      %s287 = sadd.s32 %s286, 1
      %s288 = scalar_select %p285, %s286, %s287
      %p291 = pneg %p285
      %p292 = scmp.eq.s32.totalorder %s22, 7
      %p293 = por %p291, %p292
      %p294 = scmp.ne.s32.totalorder %s286, %s289
      %p295 = scmp.eq.s32.totalorder %s22, 0
      %p296 = por %p294, %p295
      %p297 = scmp.ne.s32.totalorder %s286, %s289
      %p298 = scmp.eq.s32.totalorder %s27, 7
      %p299 = por %p297, %p298
      %p300 = scmp.ne.s32.totalorder %s289, %s290
      %p301 = scmp.eq.s32.totalorder %s27, 0
      %p302 = por %p300, %p301
      %p303 = scmp.ne.s32.totalorder %s289, %s290
      %p304 = scmp.eq.s32.totalorder %s28, 7
      %p305 = por %p303, %p304
      %p307 = scmp.ne.s32.totalorder %s290, %s306
      %p308 = scmp.eq.s32.totalorder %s28, 0
      %p309 = por %p307, %p308
      %p310 = scmp.le.s32.totalorder 1, %s22
      %p311 = scmp.lt.s32.totalorder %s22, 9
      %p312 = pnand %p310, %p311
      %p313 = pneg %p312
      // Predicated region
      $region9: #{tpu_custom_call.1} parent=5 // pred_check
        _
      $region10: #{tpu_custom_call.1} parent=5 // pred_check_branch
        %315 = sbr.rel (%p312) target = $region12
      $region11: #{tpu_custom_call.1} parent=5 // pred_region
        %s316 = ssub.s32 %s22, 1
        // Predicated region
        $region13: #{tpu_custom_call.1} parent=11 // pred_check
          %p317 = pneg %p150
        $region14: #{tpu_custom_call.1} parent=11 // pred_check_branch
          %319 = sbr.rel (%p317) target = $region16
        $region15: #{tpu_custom_call.1} parent=11 // pred_region
          _
        $region16: #{tpu_custom_call.1} parent=11 // pred_fallthru
          _
        // Predicated region
        $region17: #{tpu_custom_call.1} parent=11 // pred_check
          %p320 = pneg %p171
        $region18: #{tpu_custom_call.1} parent=11 // pred_check_branch
          %322 = sbr.rel (%p320) target = $region20
        $region19: #{tpu_custom_call.1} parent=11 // pred_region
          _
        $region20: #{tpu_custom_call.1} parent=11 // pred_fallthru
          _
        // Predicated region
        $region21: #{tpu_custom_call.1} parent=11 // pred_check
          %p323 = pneg %p192
        $region22: #{tpu_custom_call.1} parent=11 // pred_check_branch
          %325 = sbr.rel (%p323) target = $region24
        $region23: #{tpu_custom_call.1} parent=11 // pred_region
          _
        $region24: #{tpu_custom_call.1} parent=11 // pred_fallthru
          _
        // Predicated region
        $region25: #{tpu_custom_call.1} parent=11 // pred_check
          %p326 = pneg %p213
        $region26: #{tpu_custom_call.1} parent=11 // pred_check_branch
          %328 = sbr.rel (%p326) target = $region28
        $region27: #{tpu_custom_call.1} parent=11 // pred_region
          _
        $region28: #{tpu_custom_call.1} parent=11 // pred_fallthru
          _
        // Predicated region
        $region29: #{tpu_custom_call.1} parent=11 // pred_check
          %p329 = pneg %p234
        $region30: #{tpu_custom_call.1} parent=11 // pred_check_branch
          %331 = sbr.rel (%p329) target = $region32
        $region31: #{tpu_custom_call.1} parent=11 // pred_region
          _
        $region32: #{tpu_custom_call.1} parent=11 // pred_fallthru
          _
        // Predicated region
        $region33: #{tpu_custom_call.1} parent=11 // pred_check
          %p332 = pneg %p255
        $region34: #{tpu_custom_call.1} parent=11 // pred_check_branch
          %334 = sbr.rel (%p332) target = $region36
        $region35: #{tpu_custom_call.1} parent=11 // pred_region
          _
        $region36: #{tpu_custom_call.1} parent=11 // pred_fallthru
          _
        // Predicated region
        $region37: #{tpu_custom_call.1} parent=11 // pred_check
          %p335 = pneg %p276
        $region38: #{tpu_custom_call.1} parent=11 // pred_check_branch
          %337 = sbr.rel (%p335) target = $region40
        $region39: #{tpu_custom_call.1} parent=11 // pred_region
          _
        $region40: #{tpu_custom_call.1} parent=11 // pred_fallthru
          _
      $region12: #{tpu_custom_call.1} parent=5 // pred_fallthru
        _
      %p338 = scmp.lt.s32.totalorder %s22, 8
      // Predicated region
      $region41: #{tpu_custom_call.1} parent=5 // pred_check
        %p339 = pneg %p338
      $region42: #{tpu_custom_call.1} parent=5 // pred_check_branch
        %341 = sbr.rel (%p339) target = $region44
      $region43: #{tpu_custom_call.1} parent=5 // pred_region
        // Predicated region
        $region45: #{tpu_custom_call.1} parent=43 // pred_check
          %p342 = pneg %p67
        $region46: #{tpu_custom_call.1} parent=43 // pred_check_branch
          %344 = sbr.rel (%p342) target = $region48
        $region47: #{tpu_custom_call.1} parent=43 // pred_region
          %s345 = sand.u32 %s57, 1
          %s346 = scalar_lea.sflag [#allocation4], %s345
          %s347 = sand.u32 %s57, 1
          %s348 = smul.addr %s347, 128
          %s349 = scalar_lea.vmem [#allocation3], %s348
          %s350 = smul.u32 %s29, 2
          %s351 = sadd.s32 %s350, %s30
          %s352 = smul.u32 16, %s351
          %s353 = smul.u32 2, %s31
          %355 = vsyncadd %s346, 0
          %s356 = smul.addr %s352, 4
          %s357 = sadd.s32 %s353, %s356
          %s358 = smul.addr %s357, 4
          %s359 = scalar_lea.hbm %s0, %s358
          %s360 = sshll.u32 %s359, 4
          %s361 = int_to_ptr.hbm [resolvable:$true] %s360
          %s362 = sshll.u32 %s349, 4
          %s363 = int_to_ptr.vmem [resolvable:$true] %s362
          %368 = dma.hbm_to_vmem [thread:$0]  %s361, 2048, %s363, %s346, 256, 128, 8
        $region48: #{tpu_custom_call.1} parent=43 // pred_fallthru
          _
        // Predicated region
        $region49: #{tpu_custom_call.1} parent=43 // pred_check
          %p369 = pneg %p97
        $region50: #{tpu_custom_call.1} parent=43 // pred_check_branch
          %371 = sbr.rel (%p369) target = $region52
        $region51: #{tpu_custom_call.1} parent=43 // pred_region
          %s372 = smul.u32 %s29, 2
          %s373 = sadd.s32 %s372, %s30
          %p374 = scmp.lt.s32.totalorder %s373, 3
          %s375 = scalar_select %p374, %s373, 3
          %s376 = smul.addr %s375, 2
          %s377 = scalar_lea.vmem %s1, %s376
          %s378 = smul.u32 %s29, 2
          %s379 = sadd.s32 %s378, %s30
        $region52: #{tpu_custom_call.1} parent=43 // pred_fallthru
          _
        // Predicated region
        $region53: #{tpu_custom_call.1} parent=43 // pred_check
          %p380 = pneg %p123
        $region54: #{tpu_custom_call.1} parent=43 // pred_check_branch
          %382 = sbr.rel (%p380) target = $region56
        $region55: #{tpu_custom_call.1} parent=43 // pred_region
          %s383 = smul.u32 32, %s31
          %p384 = scmp.lt.s32.totalorder %s383, 63
          %s385 = scalar_select %p384, %s383, 63
          %s386 = smul.addr %s385, 4
          %s387 = scalar_lea.vmem %s2, %s386
          %s388 = smul.u32 32, %s31
        $region56: #{tpu_custom_call.1} parent=43 // pred_fallthru
          _
      $region44: #{tpu_custom_call.1} parent=5 // pred_fallthru
        _
      %p389 = scmp.le.s32.totalorder 1, %s22
      %p390 = scmp.lt.s32.totalorder %s22, 9
      %p391 = pnand %p389, %p390
      %p392 = pneg %p391
      // Predicated region
      $region57: #{tpu_custom_call.1} parent=5 // pred_check
        _
      $region58: #{tpu_custom_call.1} parent=5 // pred_check_branch
        %394 = sbr.rel (%p391) target = $region60
      $region59: #{tpu_custom_call.1} parent=5 // pred_region
        %s395 = ssub.s32 %s22, 1
        %s396 = sand.u32 %s60, 1
        %s397 = scalar_lea.sflag [#allocation4], %s396
        %s398 = sand.u32 %s60, 1
        %s399 = smul.addr %s398, 128
        %s400 = scalar_lea.vmem [#allocation3], %s399
        // Predicated region
        $region61: #{tpu_custom_call.1} parent=59 // pred_check
          %p401 = pneg %p73
        $region62: #{tpu_custom_call.1} parent=59 // pred_check_branch
          %403 = sbr.rel (%p401) target = $region64
        $region63: #{tpu_custom_call.1} parent=59 // pred_region
          %405 = dma.done %s397, 2048
        $region64: #{tpu_custom_call.1} parent=59 // pred_fallthru
          _
        %s406 = sand.u32 %s60, 1
        %s407 = scalar_lea.sflag [#allocation4], %s406
        %s408 = sand.u32 %s60, 1
        %s409 = smul.addr %s408, 128
        %s410 = scalar_lea.vmem [#allocation3], %s409
        %p411 = pneg %p73
        %p412 = pneg %p70
        %s413 = smul.u32 %s32, 2
        %s414 = sadd.s32 %s413, %s33
        %p415 = scmp.lt.s32.totalorder %s414, 3
        %s416 = scalar_select %p415, %s414, 3
        %s417 = smul.addr %s416, 2
        %s418 = scalar_lea.vmem %s1, %s417
        %p419 = pneg %p103
        %p420 = pneg %p100
        %s421 = smul.u32 32, %s34
        %p422 = scmp.lt.s32.totalorder %s421, 63
        %s423 = scalar_select %p422, %s421, 63
        %s424 = smul.addr %s423, 4
        %s425 = scalar_lea.vmem %s2, %s424
        %p426 = pneg %p129
        %p427 = pneg %p126
        %p428 = pneg %p150
        %p429 = pneg %p147
        %p430 = pneg %p171
        %p431 = pneg %p168
        %p432 = pneg %p192
        %p433 = pneg %p189
        %p434 = pneg %p213
        %p435 = pneg %p210
        %p436 = pneg %p234
        %p437 = pneg %p231
        %p438 = pneg %p255
        %p439 = pneg %p252
        %p440 = pneg %p276
        %p441 = pneg %p273
        %p442 = pneg %p302
        %p443 = pneg %p299
        %s444 = sand.u32 %s289, 1
        %s445 = scalar_lea.sflag [#allocation5], %s444
        %s446 = sand.u32 %s289, 1
        %s447 = smul.addr %s446, 4
        %s448 = scalar_lea.vmem [#allocation6], %s447
        %s449 = smul.u32 %s32, 2
        %s450 = sadd.s32 %s449, %s33
        %s451 = smul.u32 16, %s450
        %s452 = smul.u32 2, %s34
        %s453 = smul.u32 %s32, 2
        %s454 = sadd.s32 %s453, %s33
        %p455 = scmp.lt.s32.totalorder %s454, 3
        %s456 = scalar_select %p455, %s454, 3
        %s457 = smul.addr %s456, 2
        %s458 = scalar_lea.vmem %s1, %s457
        %s459 = smul.u32 %s32, 2
        %s460 = sadd.s32 %s459, %s33
        %s461 = smul.u32 32, %s34
        %p462 = scmp.lt.s32.totalorder %s461, 63
        %s463 = scalar_select %p462, %s461, 63
        %s464 = smul.addr %s463, 4
        %s465 = scalar_lea.vmem %s2, %s464
        %s466 = smul.u32 32, %s34
        %p468 = scmp.eq.s32.totalorder %s33, 0
        %p469 = scmp.eq.s32.totalorder %s34, 0
        %p470 = pnand %p468, %p469
        %p471 = pneg %p470
        // Predicated region
        $region65: #{tpu_custom_call.1} parent=59 // pred_check
          _
        $region66: #{tpu_custom_call.1} parent=59 // pred_check_branch
          %473 = sbr.rel (%p470) target = $region68
        $region67: #{tpu_custom_call.1} parent=59 // pred_region
          %vm474 = vcmask 257024
          %475 = vst.msk [vmem:[%s448] sm:$0xf] %vm474, 0.0
        $region68: #{tpu_custom_call.1} parent=59 // pred_fallthru
          _
        // Predicated region
        $region69: #{tpu_custom_call.1} parent=59 // pred_check
          %p476 = pneg %p469
        $region70: #{tpu_custom_call.1} parent=59 // pred_check_branch
          %478 = sbr.rel (%p476) target = $region72
        $region71: #{tpu_custom_call.1} parent=59 // pred_region
          %vm479 = vcmask 261120
          %480 = vst.msk [vmem:[#allocation2] sm:$0xff] %vm479, 0.0
          %481 = vst.msk [vmem:[#allocation2 + $0x8] sm:$0xff] %vm479, 0.0
          %482 = vst.msk [vmem:[#allocation2 + $0x10] sm:$0xff] %vm479, 0.0
          %483 = vst.msk [vmem:[#allocation2 + $0x18] sm:$0xff] %vm479, 0.0
          %484 = vst.msk [vmem:[#allocation2 + $0x20] sm:$0xff] %vm479, 0.0
          %485 = vst.msk [vmem:[#allocation2 + $0x28] sm:$0xff] %vm479, 0.0
          %486 = vst.msk [vmem:[#allocation2 + $0x30] sm:$0xff] %vm479, 0.0
          %487 = vst.msk [vmem:[#allocation2 + $0x38] sm:$0xff] %vm479, 0.0
          %488 = vst.msk [vmem:[#allocation2 + $0x40] sm:$0xff] %vm479, 0.0
          %489 = vst.msk [vmem:[#allocation2 + $0x48] sm:$0xff] %vm479, 0.0
          %490 = vst.msk [vmem:[#allocation2 + $0x50] sm:$0xff] %vm479, 0.0
          %491 = vst.msk [vmem:[#allocation2 + $0x58] sm:$0xff] %vm479, 0.0
          %492 = vst.msk [vmem:[#allocation2 + $0x60] sm:$0xff] %vm479, 0.0
          %493 = vst.msk [vmem:[#allocation2 + $0x68] sm:$0xff] %vm479, 0.0
          %494 = vst.msk [vmem:[#allocation2 + $0x70] sm:$0xff] %vm479, 0.0
          %495 = vst.msk [vmem:[#allocation2 + $0x78] sm:$0xff] %vm479, 0.0
        $region72: #{tpu_custom_call.1} parent=59 // pred_fallthru
          _
        %v496 = vld [vmem:[#allocation2] sm:$0xff]
        %v497 = vld [vmem:[#allocation2 + $0x8] sm:$0xff]
        %v498 = vld [vmem:[#allocation2 + $0x10] sm:$0xff]
        %v499 = vld [vmem:[#allocation2 + $0x18] sm:$0xff]
        %v500 = vld [vmem:[#allocation2 + $0x20] sm:$0xff]
        %v501 = vld [vmem:[#allocation2 + $0x28] sm:$0xff]
        %v502 = vld [vmem:[#allocation2 + $0x30] sm:$0xff]
        %v503 = vld [vmem:[#allocation2 + $0x38] sm:$0xff]
        %v504 = vld [vmem:[#allocation2 + $0x40] sm:$0xff]
        %v505 = vld [vmem:[#allocation2 + $0x48] sm:$0xff]
        %v506 = vld [vmem:[#allocation2 + $0x50] sm:$0xff]
        %v507 = vld [vmem:[#allocation2 + $0x58] sm:$0xff]
        %v508 = vld [vmem:[#allocation2 + $0x60] sm:$0xff]
        %v509 = vld [vmem:[#allocation2 + $0x68] sm:$0xff]
        %v510 = vld [vmem:[#allocation2 + $0x70] sm:$0xff]
        %v511 = vld [vmem:[#allocation2 + $0x78] sm:$0xff]
        %v512 = vld [vmem:[%s400] sm:$0xff]
        %v513 = vld [vmem:[%s400 + $0x8] sm:$0xff]
        %v514 = vld [vmem:[%s400 + $0x10] sm:$0xff]
        %v515 = vld [vmem:[%s400 + $0x18] sm:$0xff]
        %v516 = vld [vmem:[%s400 + $0x20] sm:$0xff]
        %v517 = vld [vmem:[%s400 + $0x28] sm:$0xff]
        %v518 = vld [vmem:[%s400 + $0x30] sm:$0xff]
        %v519 = vld [vmem:[%s400 + $0x38] sm:$0xff]
        %v520 = vld [vmem:[%s400 + $0x40] sm:$0xff]
        %v521 = vld [vmem:[%s400 + $0x48] sm:$0xff]
        %v522 = vld [vmem:[%s400 + $0x50] sm:$0xff]
        %v523 = vld [vmem:[%s400 + $0x58] sm:$0xff]
        %v524 = vld [vmem:[%s400 + $0x60] sm:$0xff]
        %v525 = vld [vmem:[%s400 + $0x68] sm:$0xff]
        %v526 = vld [vmem:[%s400 + $0x70] sm:$0xff]
        %v527 = vld [vmem:[%s400 + $0x78] sm:$0xff]
        %v528 = vld [vmem:[%s465] sm:$0xf]
        %v529 = vld [vmem:[%s465 + $0x4] sm:$0xf]
        %v530 = vld [vmem:[%s465 + $0x8] sm:$0xf]
        %v531 = vld [vmem:[%s465 + $0xc] sm:$0xf]
        %v532 = vld [vmem:[%s465 + $0x10] sm:$0xf]
        %v533 = vld [vmem:[%s465 + $0x14] sm:$0xf]
        %v534 = vld [vmem:[%s465 + $0x18] sm:$0xf]
        %v535 = vld [vmem:[%s465 + $0x1c] sm:$0xf]
        %v536 = vld [vmem:[%s465 + $0x20] sm:$0xf]
        %v537 = vld [vmem:[%s465 + $0x24] sm:$0xf]
        %v538 = vld [vmem:[%s465 + $0x28] sm:$0xf]
        %v539 = vld [vmem:[%s465 + $0x2c] sm:$0xf]
        %v540 = vld [vmem:[%s465 + $0x30] sm:$0xf]
        %v541 = vld [vmem:[%s465 + $0x34] sm:$0xf]
        %v542 = vld [vmem:[%s465 + $0x38] sm:$0xf]
        %v543 = vld [vmem:[%s465 + $0x3c] sm:$0xf]
        %v544 = vld [vmem:[%s465 + $0x40] sm:$0xf]
        %v545 = vld [vmem:[%s465 + $0x44] sm:$0xf]
        %v546 = vld [vmem:[%s465 + $0x48] sm:$0xf]
        %v547 = vld [vmem:[%s465 + $0x4c] sm:$0xf]
        %v548 = vld [vmem:[%s465 + $0x50] sm:$0xf]
        %v549 = vld [vmem:[%s465 + $0x54] sm:$0xf]
        %v550 = vld [vmem:[%s465 + $0x58] sm:$0xf]
        %v551 = vld [vmem:[%s465 + $0x5c] sm:$0xf]
        %v552 = vld [vmem:[%s465 + $0x60] sm:$0xf]
        %v553 = vld [vmem:[%s465 + $0x64] sm:$0xf]
        %v554 = vld [vmem:[%s465 + $0x68] sm:$0xf]
        %v555 = vld [vmem:[%s465 + $0x6c] sm:$0xf]
        %v556 = vld [vmem:[%s465 + $0x70] sm:$0xf]
        %v557 = vld [vmem:[%s465 + $0x74] sm:$0xf]
        %v558 = vld [vmem:[%s465 + $0x78] sm:$0xf]
        %v559 = vld [vmem:[%s465 + $0x7c] sm:$0xf]
        %v576 = vunpack.c.l.b16 %v512
        %v577 = vunpack.c.h.b16 %v512
        %v578 = vunpack.c.l.b16 %v513
        %v579 = vunpack.c.h.b16 %v513
        %v580 = vunpack.c.l.b16 %v514
        %v581 = vunpack.c.h.b16 %v514
        %v582 = vunpack.c.l.b16 %v515
        %v583 = vunpack.c.h.b16 %v515
        %v584 = vunpack.c.l.b16 %v516
        %v585 = vunpack.c.h.b16 %v516
        %v586 = vunpack.c.l.b16 %v517
        %v587 = vunpack.c.h.b16 %v517
        %v588 = vunpack.c.l.b16 %v518
        %v589 = vunpack.c.h.b16 %v518
        %v590 = vunpack.c.l.b16 %v519
        %v591 = vunpack.c.h.b16 %v519
        %v592 = vunpack.c.l.b16 %v520
        %v593 = vunpack.c.h.b16 %v520
        %v594 = vunpack.c.l.b16 %v521
        %v595 = vunpack.c.h.b16 %v521
        %v596 = vunpack.c.l.b16 %v522
        %v597 = vunpack.c.h.b16 %v522
        %v598 = vunpack.c.l.b16 %v523
        %v599 = vunpack.c.h.b16 %v523
        %v600 = vunpack.c.l.b16 %v524
        %v601 = vunpack.c.h.b16 %v524
        %v602 = vunpack.c.l.b16 %v525
        %v603 = vunpack.c.h.b16 %v525
        %v604 = vunpack.c.l.b16 %v526
        %v605 = vunpack.c.h.b16 %v526
        %v606 = vunpack.c.l.b16 %v527
        %v607 = vunpack.c.h.b16 %v527
        %v608 = vpack.c.b16 %v578, %v576
        %v609 = vpack.c.b16 %v579, %v577
        %v610 = vpack.c.b16 %v582, %v580
        %v611 = vpack.c.b16 %v583, %v581
        %v612 = vpack.c.b16 %v586, %v584
        %v613 = vpack.c.b16 %v587, %v585
        %v614 = vpack.c.b16 %v590, %v588
        %v615 = vpack.c.b16 %v591, %v589
        %v616 = vpack.c.b16 %v594, %v592
        %v617 = vpack.c.b16 %v595, %v593
        %v618 = vpack.c.b16 %v598, %v596
        %v619 = vpack.c.b16 %v599, %v597
        %v620 = vpack.c.b16 %v602, %v600
        %v621 = vpack.c.b16 %v603, %v601
        %v622 = vpack.c.b16 %v606, %v604
        %v623 = vpack.c.b16 %v607, %v605
        %v672 = vunpack.c.l.b16 %v528
        %v673 = vunpack.c.l.b16 %v529
        %v674 = vunpack.c.l.b16 %v530
        %v675 = vunpack.c.l.b16 %v531
        %v676 = vunpack.c.l.b16 %v532
        %v677 = vunpack.c.l.b16 %v533
        %v678 = vunpack.c.l.b16 %v534
        %v679 = vunpack.c.l.b16 %v535
        %v680 = vunpack.c.l.b16 %v536
        %v681 = vunpack.c.l.b16 %v537
        %v682 = vunpack.c.l.b16 %v538
        %v683 = vunpack.c.l.b16 %v539
        %v684 = vunpack.c.l.b16 %v540
        %v685 = vunpack.c.l.b16 %v541
        %v686 = vunpack.c.l.b16 %v542
        %v687 = vunpack.c.l.b16 %v543
        %v688 = vunpack.c.l.b16 %v544
        %v689 = vunpack.c.l.b16 %v545
        %v690 = vunpack.c.l.b16 %v546
        %v691 = vunpack.c.l.b16 %v547
        %v692 = vunpack.c.l.b16 %v548
        %v693 = vunpack.c.l.b16 %v549
        %v694 = vunpack.c.l.b16 %v550
        %v695 = vunpack.c.l.b16 %v551
        %v696 = vunpack.c.l.b16 %v552
        %v697 = vunpack.c.l.b16 %v553
        %v698 = vunpack.c.l.b16 %v554
        %v699 = vunpack.c.l.b16 %v555
        %v700 = vunpack.c.l.b16 %v556
        %v701 = vunpack.c.l.b16 %v557
        %v702 = vunpack.c.l.b16 %v558
        %v703 = vunpack.c.l.b16 %v559
        %v704 = vpack.c.b16 %v673, %v672
        %v705 = vpack.c.b16 %v675, %v674
        %v706 = vpack.c.b16 %v677, %v676
        %v707 = vpack.c.b16 %v679, %v678
        %v708 = vpack.c.b16 %v681, %v680
        %v709 = vpack.c.b16 %v683, %v682
        %v710 = vpack.c.b16 %v685, %v684
        %v711 = vpack.c.b16 %v687, %v686
        %v712 = vpack.c.b16 %v689, %v688
        %v713 = vpack.c.b16 %v691, %v690
        %v714 = vpack.c.b16 %v693, %v692
        %v715 = vpack.c.b16 %v695, %v694
        %v716 = vpack.c.b16 %v697, %v696
        %v717 = vpack.c.b16 %v699, %v698
        %v718 = vpack.c.b16 %v701, %v700
        %v719 = vpack.c.b16 %v703, %v702
        %736 = vmatpush.bf16.msra.mxu0 %v711
        %737 = vmatpush.bf16.msra.mxu0 %v710
        %738 = vmatpush.bf16.msra.mxu0 %v709
        %739 = vmatpush.bf16.msra.mxu0 %v708
        %740 = vmatpush.bf16.msra.mxu0 %v707
        %741 = vmatpush.bf16.msra.mxu0 %v706
        %742 = vmatpush.bf16.msra.mxu0 %v705
        %743 = vmatpush.bf16.msra.mxu0 %v704
        %744 = vmatmul.bf16.gmra.mxu0 %v608
        %v745 = vpop.f32.mrf.mxu0
        %v746 = vadd.f32 0.0, %v745
        %v747 = vpop.f32.mrf.mxu0
        %v748 = vadd.f32 0.0, %v747
        %749 = vmatmul.bf16.gmra.mxu0 %v610
        %v750 = vpop.f32.mrf.mxu0
        %v751 = vadd.f32 0.0, %v750
        %v752 = vpop.f32.mrf.mxu0
        %v753 = vadd.f32 0.0, %v752
        %754 = vmatmul.bf16.gmra.mxu0 %v612
        %v755 = vpop.f32.mrf.mxu0
        %v756 = vadd.f32 0.0, %v755
        %v757 = vpop.f32.mrf.mxu0
        %v758 = vadd.f32 0.0, %v757
        %759 = vmatmul.bf16.gmra.mxu0 %v614
        %v760 = vpop.f32.mrf.mxu0
        %v761 = vadd.f32 0.0, %v760
        %v762 = vpop.f32.mrf.mxu0
        %v763 = vadd.f32 0.0, %v762
        %764 = vmatmul.bf16.gmra.mxu0 %v616
        %v765 = vpop.f32.mrf.mxu0
        %v766 = vadd.f32 0.0, %v765
        %v767 = vpop.f32.mrf.mxu0
        %v768 = vadd.f32 0.0, %v767
        %769 = vmatmul.bf16.gmra.mxu0 %v618
        %v770 = vpop.f32.mrf.mxu0
        %v771 = vadd.f32 0.0, %v770
        %v772 = vpop.f32.mrf.mxu0
        %v773 = vadd.f32 0.0, %v772
        %774 = vmatmul.bf16.gmra.mxu0 %v620
        %v775 = vpop.f32.mrf.mxu0
        %v776 = vadd.f32 0.0, %v775
        %v777 = vpop.f32.mrf.mxu0
        %v778 = vadd.f32 0.0, %v777
        %779 = vmatmul.bf16.gmra.mxu0 %v622
        %v780 = vpop.f32.mrf.mxu0
        %v781 = vadd.f32 0.0, %v780
        %v782 = vpop.f32.mrf.mxu0
        %v783 = vadd.f32 0.0, %v782
        %784 = vdwg.mxu0
        %785 = vmatpush.bf16.msra.mxu0 %v719
        %786 = vmatpush.bf16.msra.mxu0 %v718
        %787 = vmatpush.bf16.msra.mxu0 %v717
        %788 = vmatpush.bf16.msra.mxu0 %v716
        %789 = vmatpush.bf16.msra.mxu0 %v715
        %790 = vmatpush.bf16.msra.mxu0 %v714
        %791 = vmatpush.bf16.msra.mxu0 %v713
        %792 = vmatpush.bf16.msra.mxu0 %v712
        %793 = vmatmul.bf16.gmra.mxu0 %v609
        %v794 = vpop.f32.mrf.mxu0
        %v795 = vadd.f32 %v746, %v794
        %v796 = vpop.f32.mrf.mxu0
        %v797 = vadd.f32 %v748, %v796
        %798 = vmatmul.bf16.gmra.mxu0 %v611
        %v799 = vpop.f32.mrf.mxu0
        %v800 = vadd.f32 %v751, %v799
        %v801 = vpop.f32.mrf.mxu0
        %v802 = vadd.f32 %v753, %v801
        %803 = vmatmul.bf16.gmra.mxu0 %v613
        %v804 = vpop.f32.mrf.mxu0
        %v805 = vadd.f32 %v756, %v804
        %v806 = vpop.f32.mrf.mxu0
        %v807 = vadd.f32 %v758, %v806
        %808 = vmatmul.bf16.gmra.mxu0 %v615
        %v809 = vpop.f32.mrf.mxu0
        %v810 = vadd.f32 %v761, %v809
        %v811 = vpop.f32.mrf.mxu0
        %v812 = vadd.f32 %v763, %v811
        %813 = vmatmul.bf16.gmra.mxu0 %v617
        %v814 = vpop.f32.mrf.mxu0
        %v815 = vadd.f32 %v766, %v814
        %v816 = vpop.f32.mrf.mxu0
        %v817 = vadd.f32 %v768, %v816
        %818 = vmatmul.bf16.gmra.mxu0 %v619
        %v819 = vpop.f32.mrf.mxu0
        %v820 = vadd.f32 %v771, %v819
        %v821 = vpop.f32.mrf.mxu0
        %v822 = vadd.f32 %v773, %v821
        %823 = vmatmul.bf16.gmra.mxu0 %v621
        %v824 = vpop.f32.mrf.mxu0
        %v825 = vadd.f32 %v776, %v824
        %v826 = vpop.f32.mrf.mxu0
        %v827 = vadd.f32 %v778, %v826
        %828 = vmatmul.bf16.gmra.mxu0 %v623
        %v829 = vpop.f32.mrf.mxu0
        %v830 = vadd.f32 %v781, %v829
        %v831 = vpop.f32.mrf.mxu0
        %v832 = vadd.f32 %v783, %v831
        %833 = vdwg.mxu0
        %v834 = vadd.f32 %v496, %v795
        %v835 = vadd.f32 %v497, %v797
        %v836 = vadd.f32 %v498, %v800
        %v837 = vadd.f32 %v499, %v802
        %v838 = vadd.f32 %v500, %v805
        %v839 = vadd.f32 %v501, %v807
        %v840 = vadd.f32 %v502, %v810
        %v841 = vadd.f32 %v503, %v812
        %v842 = vadd.f32 %v504, %v815
        %v843 = vadd.f32 %v505, %v817
        %v844 = vadd.f32 %v506, %v820
        %v845 = vadd.f32 %v507, %v822
        %v846 = vadd.f32 %v508, %v825
        %v847 = vadd.f32 %v509, %v827
        %v848 = vadd.f32 %v510, %v830
        %v849 = vadd.f32 %v511, %v832
        %vm850 = vcmask 261120
        %851 = vst.msk [vmem:[#allocation2] sm:$0xff] %vm850, %v834
        %852 = vst.msk [vmem:[#allocation2 + $0x8] sm:$0xff] %vm850, %v835
        %853 = vst.msk [vmem:[#allocation2 + $0x10] sm:$0xff] %vm850, %v836
        %854 = vst.msk [vmem:[#allocation2 + $0x18] sm:$0xff] %vm850, %v837
        %855 = vst.msk [vmem:[#allocation2 + $0x20] sm:$0xff] %vm850, %v838
        %856 = vst.msk [vmem:[#allocation2 + $0x28] sm:$0xff] %vm850, %v839
        %857 = vst.msk [vmem:[#allocation2 + $0x30] sm:$0xff] %vm850, %v840
        %858 = vst.msk [vmem:[#allocation2 + $0x38] sm:$0xff] %vm850, %v841
        %859 = vst.msk [vmem:[#allocation2 + $0x40] sm:$0xff] %vm850, %v842
        %860 = vst.msk [vmem:[#allocation2 + $0x48] sm:$0xff] %vm850, %v843
        %861 = vst.msk [vmem:[#allocation2 + $0x50] sm:$0xff] %vm850, %v844
        %862 = vst.msk [vmem:[#allocation2 + $0x58] sm:$0xff] %vm850, %v845
        %863 = vst.msk [vmem:[#allocation2 + $0x60] sm:$0xff] %vm850, %v846
        %864 = vst.msk [vmem:[#allocation2 + $0x68] sm:$0xff] %vm850, %v847
        %865 = vst.msk [vmem:[#allocation2 + $0x70] sm:$0xff] %vm850, %v848
        %866 = vst.msk [vmem:[#allocation2 + $0x78] sm:$0xff] %vm850, %v849
        %p867 = scmp.eq.s32.totalorder %s34, 1
        // Predicated region
        $region73: #{tpu_custom_call.1} parent=59 // pred_check
          %p868 = pneg %p867
        $region74: #{tpu_custom_call.1} parent=59 // pred_check_branch
          %870 = sbr.rel (%p868) target = $region76
        $region75: #{tpu_custom_call.1} parent=59 // pred_region
          %v871 = vld [vmem:[#allocation2] sm:$0xff]
          %v872 = vld [vmem:[#allocation2 + $0x8] sm:$0xff]
          %v873 = vld [vmem:[#allocation2 + $0x10] sm:$0xff]
          %v874 = vld [vmem:[#allocation2 + $0x18] sm:$0xff]
          %v875 = vld [vmem:[#allocation2 + $0x20] sm:$0xff]
          %v876 = vld [vmem:[#allocation2 + $0x28] sm:$0xff]
          %v877 = vld [vmem:[#allocation2 + $0x30] sm:$0xff]
          %v878 = vld [vmem:[#allocation2 + $0x38] sm:$0xff]
          %v879 = vld [vmem:[#allocation2 + $0x40] sm:$0xff]
          %v880 = vld [vmem:[#allocation2 + $0x48] sm:$0xff]
          %v881 = vld [vmem:[#allocation2 + $0x50] sm:$0xff]
          %v882 = vld [vmem:[#allocation2 + $0x58] sm:$0xff]
          %v883 = vld [vmem:[#allocation2 + $0x60] sm:$0xff]
          %v884 = vld [vmem:[#allocation2 + $0x68] sm:$0xff]
          %v885 = vld [vmem:[#allocation2 + $0x70] sm:$0xff]
          %v886 = vld [vmem:[#allocation2 + $0x78] sm:$0xff]
          %v887 = vld [vmem:[%s3] sm:$0x1]
          %v889 = vperm.slane %v887, 0
          %v891 = vadd.f32 %v871, %v889
          %v892 = vadd.f32 %v872, %v889
          %v893 = vadd.f32 %v873, %v889
          %v894 = vadd.f32 %v874, %v889
          %v895 = vadd.f32 %v875, %v889
          %v896 = vadd.f32 %v876, %v889
          %v897 = vadd.f32 %v877, %v889
          %v898 = vadd.f32 %v878, %v889
          %v899 = vadd.f32 %v879, %v889
          %v900 = vadd.f32 %v880, %v889
          %v901 = vadd.f32 %v881, %v889
          %v902 = vadd.f32 %v882, %v889
          %v903 = vadd.f32 %v883, %v889
          %v904 = vadd.f32 %v884, %v889
          %v905 = vadd.f32 %v885, %v889
          %v906 = vadd.f32 %v886, %v889
          %vm907 = vcmp.ge.f32.partialorder %v891, 0.0
          %vm908 = vcmp.ge.f32.partialorder %v892, 0.0
          %vm909 = vcmp.ge.f32.partialorder %v893, 0.0
          %vm910 = vcmp.ge.f32.partialorder %v894, 0.0
          %vm911 = vcmp.ge.f32.partialorder %v895, 0.0
          %vm912 = vcmp.ge.f32.partialorder %v896, 0.0
          %vm913 = vcmp.ge.f32.partialorder %v897, 0.0
          %vm914 = vcmp.ge.f32.partialorder %v898, 0.0
          %vm915 = vcmp.ge.f32.partialorder %v899, 0.0
          %vm916 = vcmp.ge.f32.partialorder %v900, 0.0
          %vm917 = vcmp.ge.f32.partialorder %v901, 0.0
          %vm918 = vcmp.ge.f32.partialorder %v902, 0.0
          %vm919 = vcmp.ge.f32.partialorder %v903, 0.0
          %vm920 = vcmp.ge.f32.partialorder %v904, 0.0
          %vm921 = vcmp.ge.f32.partialorder %v905, 0.0
          %vm922 = vcmp.ge.f32.partialorder %v906, 0.0
          %v923 = vmul.f32 %v891, 1.5
          %v924 = vmul.f32 %v892, 1.5
          %v925 = vmul.f32 %v893, 1.5
          %v926 = vmul.f32 %v894, 1.5
          %v927 = vmul.f32 %v895, 1.5
          %v928 = vmul.f32 %v896, 1.5
          %v929 = vmul.f32 %v897, 1.5
          %v930 = vmul.f32 %v898, 1.5
          %v931 = vmul.f32 %v899, 1.5
          %v932 = vmul.f32 %v900, 1.5
          %v933 = vmul.f32 %v901, 1.5
          %v934 = vmul.f32 %v902, 1.5
          %v935 = vmul.f32 %v903, 1.5
          %v936 = vmul.f32 %v904, 1.5
          %v937 = vmul.f32 %v905, 1.5
          %v938 = vmul.f32 %v906, 1.5
          %v939 = vsel %vm907, %v891, %v923
          %v940 = vsel %vm908, %v892, %v924
          %v941 = vsel %vm909, %v893, %v925
          %v942 = vsel %vm910, %v894, %v926
          %v943 = vsel %vm911, %v895, %v927
          %v944 = vsel %vm912, %v896, %v928
          %v945 = vsel %vm913, %v897, %v929
          %v946 = vsel %vm914, %v898, %v930
          %v947 = vsel %vm915, %v899, %v931
          %v948 = vsel %vm916, %v900, %v932
          %v949 = vsel %vm917, %v901, %v933
          %v950 = vsel %vm918, %v902, %v934
          %v951 = vsel %vm919, %v903, %v935
          %v952 = vsel %vm920, %v904, %v936
          %v953 = vsel %vm921, %v905, %v937
          %v954 = vsel %vm922, %v906, %v938
          %v955 = vpack.c.bf16 %v940, %v939
          %v956 = vpack.c.bf16 %v942, %v941
          %v957 = vpack.c.bf16 %v944, %v943
          %v958 = vpack.c.bf16 %v946, %v945
          %v959 = vpack.c.bf16 %v948, %v947
          %v960 = vpack.c.bf16 %v950, %v949
          %v961 = vpack.c.bf16 %v952, %v951
          %v962 = vpack.c.bf16 %v954, %v953
          %v963 = vld [vmem:[%s4] sm:$0xf]
          %v964 = vld [vmem:[%s4 + $0x4] sm:$0xf]
          %v965 = vld [vmem:[%s4 + $0x8] sm:$0xf]
          %v966 = vld [vmem:[%s4 + $0xc] sm:$0xf]
          %v967 = vld [vmem:[%s5] sm:$0x1]
          %v969 = vperm.slane %v967, 0
          %v975 = vunpack.c.l.b16 %v963
          %v976 = vunpack.c.l.b16 %v964
          %v977 = vunpack.c.l.b16 %v965
          %v978 = vunpack.c.l.b16 %v966
          %v979 = vpack.c.b16 %v976, %v975
          %v980 = vpack.c.b16 %v978, %v977
          %v984 = vsel %vm850, %v955, 0
          %v987 = vsel %vm850, %v956, 0
          %v990 = vsel %vm850, %v957, 0
          %v993 = vsel %vm850, %v958, 0
          %v996 = vsel %vm850, %v959, 0
          %v999 = vsel %vm850, %v960, 0
          %v1002 = vsel %vm850, %v961, 0
          %v1005 = vsel %vm850, %v962, 0
          %1007 = vmatpush.bf16.msra.mxu0 0
          %1008 = vmatpush.bf16.msra.mxu0 0
          %1009 = vmatpush.bf16.msra.mxu0 0
          %1010 = vmatpush.bf16.msra.mxu0 0
          %1011 = vmatpush.bf16.msra.mxu0 0
          %1012 = vmatpush.bf16.msra.mxu0 0
          %1013 = vmatpush.bf16.msra.mxu0 %v980
          %1014 = vmatpush.bf16.msra.mxu0 %v979
          %1015 = vmatmul.bf16.gmra.mxu0 %v984
          %v1016 = vpop.f32.mrf.mxu0
          %v1017 = vadd.f32 %v969, %v1016
          %v1018 = vpop.f32.mrf.mxu0
          %v1019 = vadd.f32 %v969, %v1018
          %1020 = vmatmul.bf16.gmra.mxu0 %v987
          %v1021 = vpop.f32.mrf.mxu0
          %v1022 = vadd.f32 %v969, %v1021
          %v1023 = vpop.f32.mrf.mxu0
          %v1024 = vadd.f32 %v969, %v1023
          %1025 = vmatmul.bf16.gmra.mxu0 %v990
          %v1026 = vpop.f32.mrf.mxu0
          %v1027 = vadd.f32 %v969, %v1026
          %v1028 = vpop.f32.mrf.mxu0
          %v1029 = vadd.f32 %v969, %v1028
          %1030 = vmatmul.bf16.gmra.mxu0 %v993
          %v1031 = vpop.f32.mrf.mxu0
          %v1032 = vadd.f32 %v969, %v1031
          %v1033 = vpop.f32.mrf.mxu0
          %v1034 = vadd.f32 %v969, %v1033
          %1035 = vmatmul.bf16.gmra.mxu0 %v996
          %v1036 = vpop.f32.mrf.mxu0
          %v1037 = vadd.f32 %v969, %v1036
          %v1038 = vpop.f32.mrf.mxu0
          %v1039 = vadd.f32 %v969, %v1038
          %1040 = vmatmul.bf16.gmra.mxu0 %v999
          %v1041 = vpop.f32.mrf.mxu0
          %v1042 = vadd.f32 %v969, %v1041
          %v1043 = vpop.f32.mrf.mxu0
          %v1044 = vadd.f32 %v969, %v1043
          %1045 = vmatmul.bf16.gmra.mxu0 %v1002
          %v1046 = vpop.f32.mrf.mxu0
          %v1047 = vadd.f32 %v969, %v1046
          %v1048 = vpop.f32.mrf.mxu0
          %v1049 = vadd.f32 %v969, %v1048
          %1050 = vmatmul.bf16.gmra.mxu0 %v1005
          %v1051 = vpop.f32.mrf.mxu0
          %v1052 = vadd.f32 %v969, %v1051
          %v1053 = vpop.f32.mrf.mxu0
          %v1054 = vadd.f32 %v969, %v1053
          %1055 = vdwg.mxu0
          %v1056 = vmax.f32 %v1017, 0.0
          %v1057 = vmax.f32 %v1019, 0.0
          %v1058 = vmax.f32 %v1022, 0.0
          %v1059 = vmax.f32 %v1024, 0.0
          %v1060 = vmax.f32 %v1027, 0.0
          %v1061 = vmax.f32 %v1029, 0.0
          %v1062 = vmax.f32 %v1032, 0.0
          %v1063 = vmax.f32 %v1034, 0.0
          %v1064 = vmax.f32 %v1037, 0.0
          %v1065 = vmax.f32 %v1039, 0.0
          %v1066 = vmax.f32 %v1042, 0.0
          %v1067 = vmax.f32 %v1044, 0.0
          %v1068 = vmax.f32 %v1047, 0.0
          %v1069 = vmax.f32 %v1049, 0.0
          %v1070 = vmax.f32 %v1052, 0.0
          %v1071 = vmax.f32 %v1054, 0.0
          %v1072 = vpack.c.bf16 %v1057, %v1056
          %v1073 = vpack.c.bf16 %v1059, %v1058
          %v1074 = vpack.c.bf16 %v1061, %v1060
          %v1075 = vpack.c.bf16 %v1063, %v1062
          %v1076 = vpack.c.bf16 %v1065, %v1064
          %v1077 = vpack.c.bf16 %v1067, %v1066
          %v1078 = vpack.c.bf16 %v1069, %v1068
          %v1079 = vpack.c.bf16 %v1071, %v1070
          %v1080 = vld [vmem:[%s6] sm:$0xf]
          %v1081 = vld [vmem:[%s6 + $0x4] sm:$0xf]
          %v1082 = vld [vmem:[%s6 + $0x8] sm:$0xf]
          %v1083 = vld [vmem:[%s6 + $0xc] sm:$0xf]
          %v1084 = vld [vmem:[%s7] sm:$0x1]
          %v1086 = vperm.slane %v1084, 0
          %v1092 = vunpack.c.l.b16 %v1080
          %v1093 = vunpack.c.l.b16 %v1081
          %v1094 = vunpack.c.l.b16 %v1082
          %v1095 = vunpack.c.l.b16 %v1083
          %v1096 = vpack.c.b16 %v1093, %v1092
          %v1097 = vpack.c.b16 %v1095, %v1094
          %v1101 = vsel %vm850, %v1072, 0
          %v1104 = vsel %vm850, %v1073, 0
          %v1107 = vsel %vm850, %v1074, 0
          %v1110 = vsel %vm850, %v1075, 0
          %v1113 = vsel %vm850, %v1076, 0
          %v1116 = vsel %vm850, %v1077, 0
          %v1119 = vsel %vm850, %v1078, 0
          %v1122 = vsel %vm850, %v1079, 0
          %1124 = vmatpush.bf16.msra.mxu0 0
          %1125 = vmatpush.bf16.msra.mxu0 0
          %1126 = vmatpush.bf16.msra.mxu0 0
          %1127 = vmatpush.bf16.msra.mxu0 0
          %1128 = vmatpush.bf16.msra.mxu0 0
          %1129 = vmatpush.bf16.msra.mxu0 0
          %1130 = vmatpush.bf16.msra.mxu0 %v1097
          %1131 = vmatpush.bf16.msra.mxu0 %v1096
          %1132 = vmatmul.bf16.gmra.mxu0 %v1101
          %v1133 = vpop.f32.mrf.mxu0
          %v1134 = vadd.f32 %v1086, %v1133
          %v1135 = vpop.f32.mrf.mxu0
          %v1136 = vadd.f32 %v1086, %v1135
          %1137 = vmatmul.bf16.gmra.mxu0 %v1104
          %v1138 = vpop.f32.mrf.mxu0
          %v1139 = vadd.f32 %v1086, %v1138
          %v1140 = vpop.f32.mrf.mxu0
          %v1141 = vadd.f32 %v1086, %v1140
          %1142 = vmatmul.bf16.gmra.mxu0 %v1107
          %v1143 = vpop.f32.mrf.mxu0
          %v1144 = vadd.f32 %v1086, %v1143
          %v1145 = vpop.f32.mrf.mxu0
          %v1146 = vadd.f32 %v1086, %v1145
          %1147 = vmatmul.bf16.gmra.mxu0 %v1110
          %v1148 = vpop.f32.mrf.mxu0
          %v1149 = vadd.f32 %v1086, %v1148
          %v1150 = vpop.f32.mrf.mxu0
          %v1151 = vadd.f32 %v1086, %v1150
          %1152 = vmatmul.bf16.gmra.mxu0 %v1113
          %v1153 = vpop.f32.mrf.mxu0
          %v1154 = vadd.f32 %v1086, %v1153
          %v1155 = vpop.f32.mrf.mxu0
          %v1156 = vadd.f32 %v1086, %v1155
          %1157 = vmatmul.bf16.gmra.mxu0 %v1116
          %v1158 = vpop.f32.mrf.mxu0
          %v1159 = vadd.f32 %v1086, %v1158
          %v1160 = vpop.f32.mrf.mxu0
          %v1161 = vadd.f32 %v1086, %v1160
          %1162 = vmatmul.bf16.gmra.mxu0 %v1119
          %v1163 = vpop.f32.mrf.mxu0
          %v1164 = vadd.f32 %v1086, %v1163
          %v1165 = vpop.f32.mrf.mxu0
          %v1166 = vadd.f32 %v1086, %v1165
          %1167 = vmatmul.bf16.gmra.mxu0 %v1122
          %v1168 = vpop.f32.mrf.mxu0
          %v1169 = vadd.f32 %v1086, %v1168
          %v1170 = vpop.f32.mrf.mxu0
          %v1171 = vadd.f32 %v1086, %v1170
          %1172 = vdwg.mxu0
          %v1173 = vmax.f32 %v1134, 0.0
          %v1174 = vmax.f32 %v1136, 0.0
          %v1175 = vmax.f32 %v1139, 0.0
          %v1176 = vmax.f32 %v1141, 0.0
          %v1177 = vmax.f32 %v1144, 0.0
          %v1178 = vmax.f32 %v1146, 0.0
          %v1179 = vmax.f32 %v1149, 0.0
          %v1180 = vmax.f32 %v1151, 0.0
          %v1181 = vmax.f32 %v1154, 0.0
          %v1182 = vmax.f32 %v1156, 0.0
          %v1183 = vmax.f32 %v1159, 0.0
          %v1184 = vmax.f32 %v1161, 0.0
          %v1185 = vmax.f32 %v1164, 0.0
          %v1186 = vmax.f32 %v1166, 0.0
          %v1187 = vmax.f32 %v1169, 0.0
          %v1188 = vmax.f32 %v1171, 0.0
          %v1189 = vpack.c.bf16 %v1174, %v1173
          %v1190 = vpack.c.bf16 %v1176, %v1175
          %v1191 = vpack.c.bf16 %v1178, %v1177
          %v1192 = vpack.c.bf16 %v1180, %v1179
          %v1193 = vpack.c.bf16 %v1182, %v1181
          %v1194 = vpack.c.bf16 %v1184, %v1183
          %v1195 = vpack.c.bf16 %v1186, %v1185
          %v1196 = vpack.c.bf16 %v1188, %v1187
          %v1197 = vld [vmem:[%s8] sm:$0xf]
          %v1198 = vld [vmem:[%s8 + $0x4] sm:$0xf]
          %v1199 = vld [vmem:[%s8 + $0x8] sm:$0xf]
          %v1200 = vld [vmem:[%s8 + $0xc] sm:$0xf]
          %v1201 = vld [vmem:[%s9] sm:$0x1]
          %v1203 = vperm.slane %v1201, 0
          %v1209 = vunpack.c.l.b16 %v1197
          %v1210 = vunpack.c.l.b16 %v1198
          %v1211 = vunpack.c.l.b16 %v1199
          %v1212 = vunpack.c.l.b16 %v1200
          %v1213 = vpack.c.b16 %v1210, %v1209
          %v1214 = vpack.c.b16 %v1212, %v1211
          %v1218 = vsel %vm850, %v1189, 0
          %v1221 = vsel %vm850, %v1190, 0
          %v1224 = vsel %vm850, %v1191, 0
          %v1227 = vsel %vm850, %v1192, 0
          %v1230 = vsel %vm850, %v1193, 0
          %v1233 = vsel %vm850, %v1194, 0
          %v1236 = vsel %vm850, %v1195, 0
          %v1239 = vsel %vm850, %v1196, 0
          %1241 = vmatpush.bf16.msra.mxu0 0
          %1242 = vmatpush.bf16.msra.mxu0 0
          %1243 = vmatpush.bf16.msra.mxu0 0
          %1244 = vmatpush.bf16.msra.mxu0 0
          %1245 = vmatpush.bf16.msra.mxu0 0
          %1246 = vmatpush.bf16.msra.mxu0 0
          %1247 = vmatpush.bf16.msra.mxu0 %v1214
          %1248 = vmatpush.bf16.msra.mxu0 %v1213
          %1249 = vmatmul.bf16.gmra.mxu0 %v1218
          %v1250 = vpop.f32.mrf.mxu0
          %v1251 = vadd.f32 %v1203, %v1250
          %v1252 = vpop.f32.mrf.mxu0
          %v1253 = vadd.f32 %v1203, %v1252
          %1254 = vmatmul.bf16.gmra.mxu0 %v1221
          %v1255 = vpop.f32.mrf.mxu0
          %v1256 = vadd.f32 %v1203, %v1255
          %v1257 = vpop.f32.mrf.mxu0
          %v1258 = vadd.f32 %v1203, %v1257
          %1259 = vmatmul.bf16.gmra.mxu0 %v1224
          %v1260 = vpop.f32.mrf.mxu0
          %v1261 = vadd.f32 %v1203, %v1260
          %v1262 = vpop.f32.mrf.mxu0
          %v1263 = vadd.f32 %v1203, %v1262
          %1264 = vmatmul.bf16.gmra.mxu0 %v1227
          %v1265 = vpop.f32.mrf.mxu0
          %v1266 = vadd.f32 %v1203, %v1265
          %v1267 = vpop.f32.mrf.mxu0
          %v1268 = vadd.f32 %v1203, %v1267
          %1269 = vmatmul.bf16.gmra.mxu0 %v1230
          %v1270 = vpop.f32.mrf.mxu0
          %v1271 = vadd.f32 %v1203, %v1270
          %v1272 = vpop.f32.mrf.mxu0
          %v1273 = vadd.f32 %v1203, %v1272
          %1274 = vmatmul.bf16.gmra.mxu0 %v1233
          %v1275 = vpop.f32.mrf.mxu0
          %v1276 = vadd.f32 %v1203, %v1275
          %v1277 = vpop.f32.mrf.mxu0
          %v1278 = vadd.f32 %v1203, %v1277
          %1279 = vmatmul.bf16.gmra.mxu0 %v1236
          %v1280 = vpop.f32.mrf.mxu0
          %v1281 = vadd.f32 %v1203, %v1280
          %v1282 = vpop.f32.mrf.mxu0
          %v1283 = vadd.f32 %v1203, %v1282
          %1284 = vmatmul.bf16.gmra.mxu0 %v1239
          %v1285 = vpop.f32.mrf.mxu0
          %v1286 = vadd.f32 %v1203, %v1285
          %v1287 = vpop.f32.mrf.mxu0
          %v1288 = vadd.f32 %v1203, %v1287
          %1289 = vdwg.mxu0
          %v1290 = vld [vmem:[%s448] sm:$0xf]
          %v1291 = vld [vmem:[%s458] sm:$0x3]
          %v1292 = vpack.c.bf16 %v1253, %v1251
          %v1293 = vpack.c.bf16 %v1258, %v1256
          %v1294 = vpack.c.bf16 %v1263, %v1261
          %v1295 = vpack.c.bf16 %v1268, %v1266
          %v1296 = vpack.c.bf16 %v1273, %v1271
          %v1297 = vpack.c.bf16 %v1278, %v1276
          %v1298 = vpack.c.bf16 %v1283, %v1281
          %v1299 = vpack.c.bf16 %v1288, %v1286
          %1300 = vmatpush.bf16.msra.mxu0 %v1299
          %1301 = vmatpush.bf16.msra.mxu0 %v1298
          %1302 = vmatpush.bf16.msra.mxu0 %v1297
          %1303 = vmatpush.bf16.msra.mxu0 %v1296
          %1304 = vmatpush.bf16.msra.mxu0 %v1295
          %1305 = vmatpush.bf16.msra.mxu0 %v1294
          %1306 = vmatpush.bf16.msra.mxu0 %v1293
          %1307 = vmatpush.bf16.msra.mxu0 %v1292
          %1308 = vmatmul.bf16.gmra.mxu0 %v1291
          %v1309 = vpop.f32.mrf.mxu0
          %v1310 = vadd.f32 0.0, %v1309
          %v1311 = vpop.f32.mrf.mxu0
          %1312 = vdwg.mxu0
          %v1313 = vadd.f32 %v1290, %v1310
          %vm1314 = vcmask 257024
          %1315 = vst.msk [vmem:[%s448] sm:$0xf] %vm1314, %v1313
        $region76: #{tpu_custom_call.1} parent=59 // pred_fallthru
          _
        %s1316 = sand.u32 %s289, 1
        %s1317 = scalar_lea.sflag [#allocation5], %s1316
        %s1318 = sand.u32 %s289, 1
        %s1319 = smul.addr %s1318, 4
        %s1320 = scalar_lea.vmem [#allocation6], %s1319
        // Predicated region
        $region77: #{tpu_custom_call.1} parent=59 // pred_check
          %p1321 = pneg %p299
        $region78: #{tpu_custom_call.1} parent=59 // pred_check_branch
          %1323 = sbr.rel (%p1321) target = $region80
        $region79: #{tpu_custom_call.1} parent=59 // pred_region
          %1325 = vsyncadd %s1317, 0
          %s1326 = smul.addr %s32, 4
          %s1327 = scalar_lea.hbm %s10, %s1326
          %s1329 = sshll.u32 %s1320, 4
          %s1330 = int_to_ptr.vmem [resolvable:$true] %s1329
          %s1331 = sshll.u32 %s1327, 4
          %s1332 = int_to_ptr.hbm [resolvable:$true] %s1331
          %1334 = dma.vmem_to_hbm [thread:$0]  %s1330, 64, %s1332, %s1317
        $region80: #{tpu_custom_call.1} parent=59 // pred_fallthru
          _
      $region60: #{tpu_custom_call.1} parent=5 // pred_fallthru
        _
      %p1335 = scmp.le.s32.totalorder 2, %s22
      // Predicated region
      $region81: #{tpu_custom_call.1} parent=5 // pred_check
        %p1336 = pneg %p1335
      $region82: #{tpu_custom_call.1} parent=5 // pred_check_branch
        %1338 = sbr.rel (%p1336) target = $region84
      $region83: #{tpu_custom_call.1} parent=5 // pred_region
        %s1339 = ssub.s32 %s22, 2
        // Predicated region
        $region85: #{tpu_custom_call.1} parent=83 // pred_check
          %p1340 = pneg %p305
        $region86: #{tpu_custom_call.1} parent=83 // pred_check_branch
          %1342 = sbr.rel (%p1340) target = $region88
        $region87: #{tpu_custom_call.1} parent=83 // pred_region
          %s1343 = sand.u32 %s290, 1
          %s1344 = scalar_lea.sflag [#allocation5], %s1343
          %s1345 = sand.u32 %s290, 1
          %s1346 = smul.addr %s1345, 4
          %s1347 = scalar_lea.vmem [#allocation6], %s1346
          %1349 = dma.done %s1344, 64
        $region88: #{tpu_custom_call.1} parent=83 // pred_fallthru
          _
      $region84: #{tpu_custom_call.1} parent=5 // pred_fallthru
        _
    $region6: #{tpu_custom_call.1} parent=1 // loop_footer
      %s26 = sadd.s32 1, %s22
    $region7: #{tpu_custom_call.1} parent=1 // loop_footer_branch
      %21 = sbr.rel target = $region3
    $region8: #{tpu_custom_call.1} parent=1 // loop_exit
      _
    %1350 = vsyncpa [#allocation4], 1
    %s1351 = scalar_lea.sflag [#allocation4], 1
    %1352 = vsyncpa %s1351, 1
    %1353 = vsyncpa [#allocation5], 1
    %s1354 = scalar_lea.sflag [#allocation5], 1
    %1355 = vsyncpa %s1354, 1

</llo_original>
